<compile_context>
chip_gen: v7x
topology: tpu7x:2x2x1
jax: 0.10.0
libtpu: 0.0.40
codegen_flags: <defaults>
</compile_context>

<pallas_src>
import functools
import math

import jax
import jax.numpy as jnp
import numpy as np
from jax import lax
from jax.experimental import pallas as pl
from jax.experimental.pallas import tpu as pltpu


# -----------------------------------------------------------------------------
# Fused Pallas kernel: conv1+BN1+ReLU+conv2+BN2+shortcut+ReLU for one image
# -----------------------------------------------------------------------------

def _zero_pad_block_kernel(ph_ref, w1_ref, b1_ref, w2t_ref, b2_ref, res_ref,
                           o_ref, pad_scr, *, stride, hp, ho, wo, cin, c1, cout):
    m = ho * wo

    # ---------------- conv1 (stride via phase decomposition) + bn1 + relu ----
    # ph_ref holds s*s phases stacked along rows; tap (dy, dx) of the strided
    # conv is a *static, contiguous* slice of phase (dy%s, dx%s).
    acc1 = jnp.zeros((m, c1), jnp.float32)
    for t in range(9):
        dy, dx = divmod(t, 3)
        phase = (dy % stride) * stride + (dx % stride)
        r0 = phase * hp + dy // stride
        c0 = dx // stride
        tap = ph_ref[r0:r0 + ho, c0:c0 + wo, :].astype(jnp.float32)
        # reshape in f32 (most mature relayout path), then bf16 for the MXU
        tap = tap.reshape(m, cin).astype(jnp.bfloat16)
        acc1 = acc1 + jnp.dot(tap, w1_ref[t * cin:(t + 1) * cin, :],
                              preferred_element_type=jnp.float32)
    out1 = jnp.maximum(acc1 + b1_ref[...], 0.0)          # (m, c1) f32

    # -------- conv1 output -> zero-padded VMEM scratch (1-pixel halo) --------
    pad_scr[...] = jnp.zeros_like(pad_scr)
    pad_scr[1:ho + 1, 1:wo + 1, :] = out1.reshape(ho, wo, c1)

    # -------- conv2 (stride 1) + bn2, computed transposed: (cout, m) ---------
    acc2 = jnp.zeros((cout, m), jnp.float32)
    for t in range(9):
        dy, dx = divmod(t, 3)
        tap = pad_scr[dy:dy + ho, dx:dx + wo, :].reshape(m, c1)
        tap = tap.astype(jnp.bfloat16)                   # (m, c1)
        w_t = w2t_ref[:, t * c1:(t + 1) * c1]            # (cout, c1) bf16
        # (cout, c1) @ (m, c1)^T -> (cout, m): rhs-transposed matmul
        acc2 = acc2 + lax.dot_general(
            w_t, tap, dimension_numbers=(((1,), (1,)), ((), ())),
            preferred_element_type=jnp.float32)
    acc2 = acc2 + b2_ref[...]                            # (cout, 1) bias

    # -------- shortcut: zero channel-pad in-kernel, add, relu ----------------
    res = res_ref[...]                                   # (cin, m) f32
    if cin < cout:
        res = jnp.concatenate(
            [res, jnp.zeros((cout - cin, m), jnp.float32)], axis=0)
    # lane-dense store: last dim is Ho*Wo, not Cout
    o_ref[...] = jnp.maximum(acc2 + res, 0.0).astype(o_ref.dtype)


# -----------------------------------------------------------------------------
# Parameter setup / BN folding
# -----------------------------------------------------------------------------

def _fold_bn(bn, eps=1e-5):
    s = bn["gamma"] / jnp.sqrt(bn["var"] + eps)
    b = bn["beta"] - bn["mean"] * s
    return s, b


def init_params(key, in_planes, planes):
    """Matches nn.Conv2d / nn.BatchNorm2d init in ZeroPadBlockHyper.__init__."""
    k1, k2 = jax.random.split(key)
    n = 3 * 3 * planes
    std = math.sqrt(2.0 / n)
    w1 = jax.random.normal(k1, (planes, in_planes, 3, 3), jnp.float32) * std  # OIHW
    w2 = jax.random.normal(k2, (planes, planes, 3, 3), jnp.float32) * std     # OIHW
    bn = lambda: dict(gamma=jnp.ones(planes, jnp.float32),
                      beta=jnp.zeros(planes, jnp.float32),
                      mean=jnp.zeros(planes, jnp.float32),
                      var=jnp.ones(planes, jnp.float32))
    return dict(w1=w1, w2=w2, bn1=bn(), bn2=bn())


# -----------------------------------------------------------------------------
# Forward wrapper
# -----------------------------------------------------------------------------

def zero_pad_block_hyper_forward(x_nchw, params, stride=1):
    N, Cin, H, W = x_nchw.shape
    C1 = params["w1"].shape[0]        # planes
    Cout = params["w2"].shape[0]      # planes
    s = int(stride)
    Ho = (H + 2 - 3) // s + 1
    Wo = (W + 2 - 3) // s + 1
    M = Ho * Wo
    ext = 2 // s                      # max in-phase tap offset (2 if s==1, 1 if s==2)
    Hp, Wp = Ho + ext, Wo + ext

    # Activations: NHWC, spatial zero-pad, stride-phase decomposition (O(input)
    # bytes -- NOT a 9x im2col), cast to bf16 to halve DMA bytes.
    x_nhwc = jnp.transpose(x_nchw, (0, 2, 3, 1))
    xpad = jnp.pad(x_nhwc, ((0, 0), (1, 1), (1, 1), (0, 0)))
    blocks = []
    for pr in range(s):
        for pc in range(s):
            ph = xpad[:, pr::s, pc::s, :][:, :Hp, :Wp, :]
            pad_r, pad_c = Hp - ph.shape[1], Wp - ph.shape[2]
            if pad_r or pad_c:
                ph = jnp.pad(ph, ((0, 0), (0, pad_r), (0, pad_c), (0, 0)))
            blocks.append(ph)
    phases = jnp.concatenate(blocks, axis=1).astype(jnp.bfloat16)  # (N, s*s*Hp, Wp, Cin)

    # Weights with BN scale folded in, bf16.  w2 is pre-transposed to
    # (Cout, 9*C1) so the kernel emits a lane-dense (Cout, Ho*Wo) block.
    s1, b1 = _fold_bn(params["bn1"])
    s2, b2 = _fold_bn(params["bn2"])
    w1m = (jnp.transpose(params["w1"], (2, 3, 1, 0)).reshape(9 * Cin, C1)
           * s1[None, :]).astype(jnp.bfloat16)
    w2t = (jnp.transpose(params["w2"], (0, 2, 3, 1)).reshape(Cout, 9 * C1)
           * s2[:, None]).astype(jnp.bfloat16)
    b1 = b1.reshape(1, C1).astype(jnp.float32)
    b2 = b2.reshape(Cout, 1).astype(jnp.float32)

    # Shortcut: AvgPool2d(kernel=1, stride=s) == strided subsample.  NCHW input
    # is already channels-first, so no transpose; unpadded (Cin) -- the zero
    # channel-pad is done inside the kernel.
    res = x_nchw[:, :, ::s, ::s].reshape(N, Cin, M).astype(jnp.float32)

    kernel = functools.partial(_zero_pad_block_kernel, stride=s, hp=Hp, ho=Ho,
                               wo=Wo, cin=Cin, c1=C1, cout=Cout)

    out = pl.pallas_call(
        kernel,
        out_shape=jax.ShapeDtypeStruct((N, Cout, M), jnp.float32),
        grid=(N,),
        in_specs=[
            pl.BlockSpec((None, s * s * Hp, Wp, Cin), lambda n: (n, 0, 0, 0)),
            pl.BlockSpec((9 * Cin, C1), lambda n: (0, 0)),
            pl.BlockSpec((1, C1), lambda n: (0, 0)),
            pl.BlockSpec((Cout, 9 * C1), lambda n: (0, 0)),
            pl.BlockSpec((Cout, 1), lambda n: (0, 0)),
            pl.BlockSpec((None, Cin, M), lambda n: (n, 0, 0)),
        ],
        out_specs=pl.BlockSpec((None, Cout, M), lambda n: (n, 0, 0)),
        scratch_shapes=[pltpu.VMEM((Ho + 2, Wo + 2, C1), jnp.float32)],
        compiler_params=pltpu.CompilerParams(
            dimension_semantics=("parallel",),
            vmem_limit_bytes=48 * 1024 * 1024),
    )(phases, w1m, b1, w2t, b2, res)

    # (N, Cout, Ho*Wo) is already NCHW up to a free reshape.
    return out.reshape(N, Cout, Ho, Wo)


# -----------------------------------------------------------------------------
# Pure-JAX f32 reference (for correctness check)
# -----------------------------------------------------------------------------

def _reference(x_nchw, params, stride):
    def bn(y, bnp):
        sc = bnp["gamma"] / jnp.sqrt(bnp["var"] + 1e-5)
        bb = bnp["beta"] - bnp["mean"] * sc
        return y * sc[None, :, None, None] + bb[None, :, None, None]

    dn1 = lax.conv_dimension_numbers(x_nchw.shape, params["w1"].shape,
                                     ("NCHW", "OIHW", "NCHW"))
    out = lax.conv_general_dilated(x_nchw, params["w1"], (stride, stride),
                                   ((1, 1), (1, 1)), dimension_numbers=dn1)
    out = jax.nn.relu(bn(out, params["bn1"]))
    dn2 = lax.conv_dimension_numbers(out.shape, params["w2"].shape,
                                     ("NCHW", "OIHW", "NCHW"))
    out = bn(lax.conv_general_dilated(out, params["w2"], (1, 1),
                                      ((1, 1), (1, 1)), dimension_numbers=dn2),
             params["bn2"])
    sc = x_nchw[:, :, ::stride, ::stride]
    sc = jnp.pad(sc, ((0, 0), (0, out.shape[1] - x_nchw.shape[1]), (0, 0), (0, 0)))
    return jax.nn.relu(out + sc)


# -----------------------------------------------------------------------------
# Main
# -----------------------------------------------------------------------------

if __name__ == "__main__":
    key = jax.random.PRNGKey(0)
    in_planes, planes, stride = 4, 8, 2
    kx, kp = jax.random.split(key)
    x = jax.random.normal(kx, (2, in_planes, 16, 16), jnp.float32)   # NCHW

    params = init_params(kp, in_planes, planes)

    out = jax.block_until_ready(
        zero_pad_block_hyper_forward(x, params, stride=stride))
    ref = jax.block_until_ready(_reference(x, params, stride))

    assert out.shape == ref.shape, (out.shape, ref.shape)
    # bf16 MXU operands -> tolerance relaxed from 1e-4 to 3e-2 (per review).
    np.testing.assert_allclose(np.asarray(out), np.asarray(ref),
                               rtol=3e-2, atol=3e-2)
    print("KERNEL_OK")
</pallas_src>

<mosaic_0001>
module attributes {stable_mosaic.version = 11 : i64} {
  func.func @_zero_pad_block_kernel(%arg0: i32, %arg1: memref<1x36x9x4xbf16, #tpu.memory_space<vmem>>, %arg2: memref<36x8xbf16, #tpu.memory_space<vmem>>, %arg3: memref<1x8xf32, #tpu.memory_space<vmem>>, %arg4: memref<8x72xbf16, #tpu.memory_space<vmem>>, %arg5: memref<8x1xf32, #tpu.memory_space<vmem>>, %arg6: memref<1x4x64xf32, #tpu.memory_space<vmem>>, %arg7: memref<1x8x64xf32, #tpu.memory_space<vmem>>, %arg8: memref<10x10x8xf32, #tpu.memory_space<vmem>>) attributes {dimension_semantics = [#tpu.dimension_semantics<parallel>], iteration_bounds = array<i64: 2>, scalar_prefetch = 0 : i64, scratch_operands = 1 : i64, tpu.core_type = #tpu.core_type<tc>, window_params = [{transform_indices = @transform_0, window_bounds = array<i64: 1, 36, 9, 4>}, {pipeline_mode = #tpu.pipeline_mode<synchronous>, transform_indices = @transform_1, window_bounds = array<i64: 36, 8>}, {pipeline_mode = #tpu.pipeline_mode<synchronous>, transform_indices = @transform_2, window_bounds = array<i64: 1, 8>}, {pipeline_mode = #tpu.pipeline_mode<synchronous>, transform_indices = @transform_3, window_bounds = array<i64: 8, 72>}, {pipeline_mode = #tpu.pipeline_mode<synchronous>, transform_indices = @transform_4, window_bounds = array<i64: 8, 1>}, {transform_indices = @transform_5, window_bounds = array<i64: 1, 4, 64>}, {transform_indices = @transform_6, window_bounds = array<i64: 1, 8, 64>}]} {
    %cst = arith.constant 0.000000e+00 : f32
    %0 = vector.broadcast %cst : f32 to vector<64x8xf32>
    %c0 = arith.constant 0 : index
    %c0_0 = arith.constant 0 : index
    %c0_1 = arith.constant 0 : index
    %c0_2 = arith.constant 0 : index
    %1 = vector.load %arg1[%c0, %c0_0, %c0_1, %c0_2] : memref<1x36x9x4xbf16, #tpu.memory_space<vmem>>, vector<1x8x8x4xbf16>
    %2 = vector.shape_cast %1 : vector<1x8x8x4xbf16> to vector<8x8x4xbf16>
    %3 = arith.extf %2 : vector<8x8x4xbf16> to vector<8x8x4xf32>
    %4 = vector.shape_cast %3 : vector<8x8x4xf32> to vector<64x4xf32>
    %5 = arith.truncf %4 : vector<64x4xf32> to vector<64x4xbf16>
    %c0_3 = arith.constant 0 : index
    %c0_4 = arith.constant 0 : index
    %6 = vector.load %arg2[%c0_3, %c0_4] : memref<36x8xbf16, #tpu.memory_space<vmem>>, vector<4x8xbf16>
    %cst_5 = arith.constant dense<0.000000e+00> : vector<64x8xf32>
    %7 = tpu.matmul %5, %6, %cst_5 {dimension_numbers = #tpu.dot_dimension_numbers<[1], [0], [0], [1], [0, 0, 1, 1], [], []>} : vector<64x4xbf16>, vector<4x8xbf16>, vector<64x8xf32> -> vector<64x8xf32>
    %8 = arith.addf %0, %7 : vector<64x8xf32>
    %c0_6 = arith.constant 0 : index
    %c9 = arith.constant 9 : index
    %c0_7 = arith.constant 0 : index
    %c0_8 = arith.constant 0 : index
    %9 = vector.load %arg1[%c0_6, %c9, %c0_7, %c0_8] : memref<1x36x9x4xbf16, #tpu.memory_space<vmem>>, vector<1x8x8x4xbf16>
    %10 = vector.shape_cast %9 : vector<1x8x8x4xbf16> to vector<8x8x4xbf16>
    %11 = arith.extf %10 : vector<8x8x4xbf16> to vector<8x8x4xf32>
    %12 = vector.shape_cast %11 : vector<8x8x4xf32> to vector<64x4xf32>
    %13 = arith.truncf %12 : vector<64x4xf32> to vector<64x4xbf16>
    %c4 = arith.constant 4 : index
    %c0_9 = arith.constant 0 : index
    %14 = vector.load %arg2[%c4, %c0_9] : memref<36x8xbf16, #tpu.memory_space<vmem>>, vector<4x8xbf16>
    %cst_10 = arith.constant dense<0.000000e+00> : vector<64x8xf32>
    %15 = tpu.matmul %13, %14, %cst_10 {dimension_numbers = #tpu.dot_dimension_numbers<[1], [0], [0], [1], [0, 0, 1, 1], [], []>} : vector<64x4xbf16>, vector<4x8xbf16>, vector<64x8xf32> -> vector<64x8xf32>
    %16 = arith.addf %8, %15 : vector<64x8xf32>
    %c0_11 = arith.constant 0 : index
    %c0_12 = arith.constant 0 : index
    %c1 = arith.constant 1 : index
    %c0_13 = arith.constant 0 : index
    %17 = vector.load %arg1[%c0_11, %c0_12, %c1, %c0_13] : memref<1x36x9x4xbf16, #tpu.memory_space<vmem>>, vector<1x8x8x4xbf16>
    %18 = vector.shape_cast %17 : vector<1x8x8x4xbf16> to vector<8x8x4xbf16>
    %19 = arith.extf %18 : vector<8x8x4xbf16> to vector<8x8x4xf32>
    %20 = vector.shape_cast %19 : vector<8x8x4xf32> to vector<64x4xf32>
    %21 = arith.truncf %20 : vector<64x4xf32> to vector<64x4xbf16>
    %c8 = arith.constant 8 : index
    %c0_14 = arith.constant 0 : index
    %22 = vector.load %arg2[%c8, %c0_14] : memref<36x8xbf16, #tpu.memory_space<vmem>>, vector<4x8xbf16>
    %cst_15 = arith.constant dense<0.000000e+00> : vector<64x8xf32>
    %23 = tpu.matmul %21, %22, %cst_15 {dimension_numbers = #tpu.dot_dimension_numbers<[1], [0], [0], [1], [0, 0, 1, 1], [], []>} : vector<64x4xbf16>, vector<4x8xbf16>, vector<64x8xf32> -> vector<64x8xf32>
    %24 = arith.addf %16, %23 : vector<64x8xf32>
    %c0_16 = arith.constant 0 : index
    %c18 = arith.constant 18 : index
    %c0_17 = arith.constant 0 : index
    %c0_18 = arith.constant 0 : index
    %25 = vector.load %arg1[%c0_16, %c18, %c0_17, %c0_18] : memref<1x36x9x4xbf16, #tpu.memory_space<vmem>>, vector<1x8x8x4xbf16>
    %26 = vector.shape_cast %25 : vector<1x8x8x4xbf16> to vector<8x8x4xbf16>
    %27 = arith.extf %26 : vector<8x8x4xbf16> to vector<8x8x4xf32>
    %28 = vector.shape_cast %27 : vector<8x8x4xf32> to vector<64x4xf32>
    %29 = arith.truncf %28 : vector<64x4xf32> to vector<64x4xbf16>
    %c12 = arith.constant 12 : index
    %c0_19 = arith.constant 0 : index
    %30 = vector.load %arg2[%c12, %c0_19] : memref<36x8xbf16, #tpu.memory_space<vmem>>, vector<4x8xbf16>
    %cst_20 = arith.constant dense<0.000000e+00> : vector<64x8xf32>
    %31 = tpu.matmul %29, %30, %cst_20 {dimension_numbers = #tpu.dot_dimension_numbers<[1], [0], [0], [1], [0, 0, 1, 1], [], []>} : vector<64x4xbf16>, vector<4x8xbf16>, vector<64x8xf32> -> vector<64x8xf32>
    %32 = arith.addf %24, %31 : vector<64x8xf32>
    %c0_21 = arith.constant 0 : index
    %c27 = arith.constant 27 : index
    %c0_22 = arith.constant 0 : index
    %c0_23 = arith.constant 0 : index
    %33 = vector.load %arg1[%c0_21, %c27, %c0_22, %c0_23] : memref<1x36x9x4xbf16, #tpu.memory_space<vmem>>, vector<1x8x8x4xbf16>
    %34 = vector.shape_cast %33 : vector<1x8x8x4xbf16> to vector<8x8x4xbf16>
    %35 = arith.extf %34 : vector<8x8x4xbf16> to vector<8x8x4xf32>
    %36 = vector.shape_cast %35 : vector<8x8x4xf32> to vector<64x4xf32>
    %37 = arith.truncf %36 : vector<64x4xf32> to vector<64x4xbf16>
    %c16 = arith.constant 16 : index
    %c0_24 = arith.constant 0 : index
    %38 = vector.load %arg2[%c16, %c0_24] : memref<36x8xbf16, #tpu.memory_space<vmem>>, vector<4x8xbf16>
    %cst_25 = arith.constant dense<0.000000e+00> : vector<64x8xf32>
    %39 = tpu.matmul %37, %38, %cst_25 {dimension_numbers = #tpu.dot_dimension_numbers<[1], [0], [0], [1], [0, 0, 1, 1], [], []>} : vector<64x4xbf16>, vector<4x8xbf16>, vector<64x8xf32> -> vector<64x8xf32>
    %40 = arith.addf %32, %39 : vector<64x8xf32>
    %c0_26 = arith.constant 0 : index
    %c18_27 = arith.constant 18 : index
    %c1_28 = arith.constant 1 : index
    %c0_29 = arith.constant 0 : index
    %41 = vector.load %arg1[%c0_26, %c18_27, %c1_28, %c0_29] : memref<1x36x9x4xbf16, #tpu.memory_space<vmem>>, vector<1x8x8x4xbf16>
    %42 = vector.shape_cast %41 : vector<1x8x8x4xbf16> to vector<8x8x4xbf16>
    %43 = arith.extf %42 : vector<8x8x4xbf16> to vector<8x8x4xf32>
    %44 = vector.shape_cast %43 : vector<8x8x4xf32> to vector<64x4xf32>
    %45 = arith.truncf %44 : vector<64x4xf32> to vector<64x4xbf16>
    %c20 = arith.constant 20 : index
    %c0_30 = arith.constant 0 : index
    %46 = vector.load %arg2[%c20, %c0_30] : memref<36x8xbf16, #tpu.memory_space<vmem>>, vector<4x8xbf16>
    %cst_31 = arith.constant dense<0.000000e+00> : vector<64x8xf32>
    %47 = tpu.matmul %45, %46, %cst_31 {dimension_numbers = #tpu.dot_dimension_numbers<[1], [0], [0], [1], [0, 0, 1, 1], [], []>} : vector<64x4xbf16>, vector<4x8xbf16>, vector<64x8xf32> -> vector<64x8xf32>
    %48 = arith.addf %40, %47 : vector<64x8xf32>
    %c0_32 = arith.constant 0 : index
    %c1_33 = arith.constant 1 : index
    %c0_34 = arith.constant 0 : index
    %c0_35 = arith.constant 0 : index
    %49 = vector.load %arg1[%c0_32, %c1_33, %c0_34, %c0_35] : memref<1x36x9x4xbf16, #tpu.memory_space<vmem>>, vector<1x8x8x4xbf16>
    %50 = vector.shape_cast %49 : vector<1x8x8x4xbf16> to vector<8x8x4xbf16>
    %51 = arith.extf %50 : vector<8x8x4xbf16> to vector<8x8x4xf32>
    %52 = vector.shape_cast %51 : vector<8x8x4xf32> to vector<64x4xf32>
    %53 = arith.truncf %52 : vector<64x4xf32> to vector<64x4xbf16>
    %c24 = arith.constant 24 : index
    %c0_36 = arith.constant 0 : index
    %54 = vector.load %arg2[%c24, %c0_36] : memref<36x8xbf16, #tpu.memory_space<vmem>>, vector<4x8xbf16>
    %cst_37 = arith.constant dense<0.000000e+00> : vector<64x8xf32>
    %55 = tpu.matmul %53, %54, %cst_37 {dimension_numbers = #tpu.dot_dimension_numbers<[1], [0], [0], [1], [0, 0, 1, 1], [], []>} : vector<64x4xbf16>, vector<4x8xbf16>, vector<64x8xf32> -> vector<64x8xf32>
    %56 = arith.addf %48, %55 : vector<64x8xf32>
    %c0_38 = arith.constant 0 : index
    %c10 = arith.constant 10 : index
    %c0_39 = arith.constant 0 : index
    %c0_40 = arith.constant 0 : index
    %57 = vector.load %arg1[%c0_38, %c10, %c0_39, %c0_40] : memref<1x36x9x4xbf16, #tpu.memory_space<vmem>>, vector<1x8x8x4xbf16>
    %58 = vector.shape_cast %57 : vector<1x8x8x4xbf16> to vector<8x8x4xbf16>
    %59 = arith.extf %58 : vector<8x8x4xbf16> to vector<8x8x4xf32>
    %60 = vector.shape_cast %59 : vector<8x8x4xf32> to vector<64x4xf32>
    %61 = arith.truncf %60 : vector<64x4xf32> to vector<64x4xbf16>
    %c28 = arith.constant 28 : index
    %c0_41 = arith.constant 0 : index
    %62 = vector.load %arg2[%c28, %c0_41] : memref<36x8xbf16, #tpu.memory_space<vmem>>, vector<4x8xbf16>
    %cst_42 = arith.constant dense<0.000000e+00> : vector<64x8xf32>
    %63 = tpu.matmul %61, %62, %cst_42 {dimension_numbers = #tpu.dot_dimension_numbers<[1], [0], [0], [1], [0, 0, 1, 1], [], []>} : vector<64x4xbf16>, vector<4x8xbf16>, vector<64x8xf32> -> vector<64x8xf32>
    %64 = arith.addf %56, %63 : vector<64x8xf32>
    %c0_43 = arith.constant 0 : index
    %c1_44 = arith.constant 1 : index
    %c1_45 = arith.constant 1 : index
    %c0_46 = arith.constant 0 : index
    %65 = vector.load %arg1[%c0_43, %c1_44, %c1_45, %c0_46] : memref<1x36x9x4xbf16, #tpu.memory_space<vmem>>, vector<1x8x8x4xbf16>
    %66 = vector.shape_cast %65 : vector<1x8x8x4xbf16> to vector<8x8x4xbf16>
    %67 = arith.extf %66 : vector<8x8x4xbf16> to vector<8x8x4xf32>
    %68 = vector.shape_cast %67 : vector<8x8x4xf32> to vector<64x4xf32>
    %69 = arith.truncf %68 : vector<64x4xf32> to vector<64x4xbf16>
    %c32 = arith.constant 32 : index
    %c0_47 = arith.constant 0 : index
    %70 = vector.load %arg2[%c32, %c0_47] : memref<36x8xbf16, #tpu.memory_space<vmem>>, vector<4x8xbf16>
    %cst_48 = arith.constant dense<0.000000e+00> : vector<64x8xf32>
    %71 = tpu.matmul %69, %70, %cst_48 {dimension_numbers = #tpu.dot_dimension_numbers<[1], [0], [0], [1], [0, 0, 1, 1], [], []>} : vector<64x4xbf16>, vector<4x8xbf16>, vector<64x8xf32> -> vector<64x8xf32>
    %72 = arith.addf %64, %71 : vector<64x8xf32>
    %c0_49 = arith.constant 0 : index
    %c0_50 = arith.constant 0 : index
    %73 = vector.load %arg3[%c0_49, %c0_50] : memref<1x8xf32, #tpu.memory_space<vmem>>, vector<1x8xf32>
    %74 = vector.broadcast %73 : vector<1x8xf32> to vector<64x8xf32>
    %75 = arith.addf %72, %74 : vector<64x8xf32>
    %cst_51 = arith.constant 0.000000e+00 : f32
    %76 = vector.broadcast %cst_51 : f32 to vector<64x8xf32>
    %77 = arith.maximumf %75, %76 : vector<64x8xf32>
    %cst_52 = arith.constant 0.000000e+00 : f32
    %78 = vector.broadcast %cst_52 : f32 to vector<10x10x8xf32>
    %c0_53 = arith.constant 0 : index
    %c0_54 = arith.constant 0 : index
    %c0_55 = arith.constant 0 : index
    %79 = vector.load %arg8[%c0_53, %c0_54, %c0_55] : memref<10x10x8xf32, #tpu.memory_space<vmem>>, vector<10x10x8xf32>
    tpu.vector_store %arg8[%c0_53, %c0_54, %c0_55], %78 {strides = array<i32>} : memref<10x10x8xf32, #tpu.memory_space<vmem>>, vector<10x10x8xf32>,
    %80 = vector.shape_cast %77 : vector<64x8xf32> to vector<8x8x8xf32>
    %c1_56 = arith.constant 1 : index
    %c1_57 = arith.constant 1 : index
    %c0_58 = arith.constant 0 : index
    %81 = vector.load %arg8[%c1_56, %c1_57, %c0_58] : memref<10x10x8xf32, #tpu.memory_space<vmem>>, vector<8x8x8xf32>
    tpu.vector_store %arg8[%c1_56, %c1_57, %c0_58], %80 {strides = array<i32>} : memref<10x10x8xf32, #tpu.memory_space<vmem>>, vector<8x8x8xf32>,
    %cst_59 = arith.constant 0.000000e+00 : f32
    %82 = vector.broadcast %cst_59 : f32 to vector<8x64xf32>
    %c0_60 = arith.constant 0 : index
    %c0_61 = arith.constant 0 : index
    %c0_62 = arith.constant 0 : index
    %83 = vector.load %arg8[%c0_60, %c0_61, %c0_62] : memref<10x10x8xf32, #tpu.memory_space<vmem>>, vector<8x8x8xf32>
    %84 = vector.shape_cast %83 : vector<8x8x8xf32> to vector<64x8xf32>
    %85 = arith.truncf %84 : vector<64x8xf32> to vector<64x8xbf16>
    %c0_63 = arith.constant 0 : index
    %c0_64 = arith.constant 0 : index
    %86 = vector.load %arg4[%c0_63, %c0_64] : memref<8x72xbf16, #tpu.memory_space<vmem>>, vector<8x8xbf16>
    %cst_65 = arith.constant dense<0.000000e+00> : vector<8x64xf32>
    %87 = tpu.matmul %86, %85, %cst_65 {dimension_numbers = #tpu.dot_dimension_numbers<[1], [1], [0], [0], [0, 0, 1, 0], [], []>} : vector<8x8xbf16>, vector<64x8xbf16>, vector<8x64xf32> -> vector<8x64xf32>
    %88 = arith.addf %82, %87 : vector<8x64xf32>
    %c0_66 = arith.constant 0 : index
    %c1_67 = arith.constant 1 : index
    %c0_68 = arith.constant 0 : index
    %89 = vector.load %arg8[%c0_66, %c1_67, %c0_68] : memref<10x10x8xf32, #tpu.memory_space<vmem>>, vector<8x8x8xf32>
    %90 = vector.shape_cast %89 : vector<8x8x8xf32> to vector<64x8xf32>
    %91 = arith.truncf %90 : vector<64x8xf32> to vector<64x8xbf16>
    %c0_69 = arith.constant 0 : index
    %c8_70 = arith.constant 8 : index
    %92 = vector.load %arg4[%c0_69, %c8_70] : memref<8x72xbf16, #tpu.memory_space<vmem>>, vector<8x8xbf16>
    %cst_71 = arith.constant dense<0.000000e+00> : vector<8x64xf32>
    %93 = tpu.matmul %92, %91, %cst_71 {dimension_numbers = #tpu.dot_dimension_numbers<[1], [1], [0], [0], [0, 0, 1, 0], [], []>} : vector<8x8xbf16>, vector<64x8xbf16>, vector<8x64xf32> -> vector<8x64xf32>
    %94 = arith.addf %88, %93 : vector<8x64xf32>
    %c0_72 = arith.constant 0 : index
    %c2 = arith.constant 2 : index
    %c0_73 = arith.constant 0 : index
    %95 = vector.load %arg8[%c0_72, %c2, %c0_73] : memref<10x10x8xf32, #tpu.memory_space<vmem>>, vector<8x8x8xf32>
    %96 = vector.shape_cast %95 : vector<8x8x8xf32> to vector<64x8xf32>
    %97 = arith.truncf %96 : vector<64x8xf32> to vector<64x8xbf16>
    %c0_74 = arith.constant 0 : index
    %c16_75 = arith.constant 16 : index
    %98 = vector.load %arg4[%c0_74, %c16_75] : memref<8x72xbf16, #tpu.memory_space<vmem>>, vector<8x8xbf16>
    %cst_76 = arith.constant dense<0.000000e+00> : vector<8x64xf32>
    %99 = tpu.matmul %98, %97, %cst_76 {dimension_numbers = #tpu.dot_dimension_numbers<[1], [1], [0], [0], [0, 0, 1, 0], [], []>} : vector<8x8xbf16>, vector<64x8xbf16>, vector<8x64xf32> -> vector<8x64xf32>
    %100 = arith.addf %94, %99 : vector<8x64xf32>
    %c1_77 = arith.constant 1 : index
    %c0_78 = arith.constant 0 : index
    %c0_79 = arith.constant 0 : index
    %101 = vector.load %arg8[%c1_77, %c0_78, %c0_79] : memref<10x10x8xf32, #tpu.memory_space<vmem>>, vector<8x8x8xf32>
    %102 = vector.shape_cast %101 : vector<8x8x8xf32> to vector<64x8xf32>
    %103 = arith.truncf %102 : vector<64x8xf32> to vector<64x8xbf16>
    %c0_80 = arith.constant 0 : index
    %c24_81 = arith.constant 24 : index
    %104 = vector.load %arg4[%c0_80, %c24_81] : memref<8x72xbf16, #tpu.memory_space<vmem>>, vector<8x8xbf16>
    %cst_82 = arith.constant dense<0.000000e+00> : vector<8x64xf32>
    %105 = tpu.matmul %104, %103, %cst_82 {dimension_numbers = #tpu.dot_dimension_numbers<[1], [1], [0], [0], [0, 0, 1, 0], [], []>} : vector<8x8xbf16>, vector<64x8xbf16>, vector<8x64xf32> -> vector<8x64xf32>
    %106 = arith.addf %100, %105 : vector<8x64xf32>
    %c1_83 = arith.constant 1 : index
    %c1_84 = arith.constant 1 : index
    %c0_85 = arith.constant 0 : index
    %107 = vector.load %arg8[%c1_83, %c1_84, %c0_85] : memref<10x10x8xf32, #tpu.memory_space<vmem>>, vector<8x8x8xf32>
    %108 = vector.shape_cast %107 : vector<8x8x8xf32> to vector<64x8xf32>
    %109 = arith.truncf %108 : vector<64x8xf32> to vector<64x8xbf16>
    %c0_86 = arith.constant 0 : index
    %c32_87 = arith.constant 32 : index
    %110 = vector.load %arg4[%c0_86, %c32_87] : memref<8x72xbf16, #tpu.memory_space<vmem>>, vector<8x8xbf16>
    %cst_88 = arith.constant dense<0.000000e+00> : vector<8x64xf32>
    %111 = tpu.matmul %110, %109, %cst_88 {dimension_numbers = #tpu.dot_dimension_numbers<[1], [1], [0], [0], [0, 0, 1, 0], [], []>} : vector<8x8xbf16>, vector<64x8xbf16>, vector<8x64xf32> -> vector<8x64xf32>
    %112 = arith.addf %106, %111 : vector<8x64xf32>
    %c1_89 = arith.constant 1 : index
    %c2_90 = arith.constant 2 : index
    %c0_91 = arith.constant 0 : index
    %113 = vector.load %arg8[%c1_89, %c2_90, %c0_91] : memref<10x10x8xf32, #tpu.memory_space<vmem>>, vector<8x8x8xf32>
    %114 = vector.shape_cast %113 : vector<8x8x8xf32> to vector<64x8xf32>
    %115 = arith.truncf %114 : vector<64x8xf32> to vector<64x8xbf16>
    %c0_92 = arith.constant 0 : index
    %c40 = arith.constant 40 : index
    %116 = vector.load %arg4[%c0_92, %c40] : memref<8x72xbf16, #tpu.memory_space<vmem>>, vector<8x8xbf16>
    %cst_93 = arith.constant dense<0.000000e+00> : vector<8x64xf32>
    %117 = tpu.matmul %116, %115, %cst_93 {dimension_numbers = #tpu.dot_dimension_numbers<[1], [1], [0], [0], [0, 0, 1, 0], [], []>} : vector<8x8xbf16>, vector<64x8xbf16>, vector<8x64xf32> -> vector<8x64xf32>
    %118 = arith.addf %112, %117 : vector<8x64xf32>
    %c2_94 = arith.constant 2 : index
    %c0_95 = arith.constant 0 : index
    %c0_96 = arith.constant 0 : index
    %119 = vector.load %arg8[%c2_94, %c0_95, %c0_96] : memref<10x10x8xf32, #tpu.memory_space<vmem>>, vector<8x8x8xf32>
    %120 = vector.shape_cast %119 : vector<8x8x8xf32> to vector<64x8xf32>
    %121 = arith.truncf %120 : vector<64x8xf32> to vector<64x8xbf16>
    %c0_97 = arith.constant 0 : index
    %c48 = arith.constant 48 : index
    %122 = vector.load %arg4[%c0_97, %c48] : memref<8x72xbf16, #tpu.memory_space<vmem>>, vector<8x8xbf16>
    %cst_98 = arith.constant dense<0.000000e+00> : vector<8x64xf32>
    %123 = tpu.matmul %122, %121, %cst_98 {dimension_numbers = #tpu.dot_dimension_numbers<[1], [1], [0], [0], [0, 0, 1, 0], [], []>} : vector<8x8xbf16>, vector<64x8xbf16>, vector<8x64xf32> -> vector<8x64xf32>
    %124 = arith.addf %118, %123 : vector<8x64xf32>
    %c2_99 = arith.constant 2 : index
    %c1_100 = arith.constant 1 : index
    %c0_101 = arith.constant 0 : index
    %125 = vector.load %arg8[%c2_99, %c1_100, %c0_101] : memref<10x10x8xf32, #tpu.memory_space<vmem>>, vector<8x8x8xf32>
    %126 = vector.shape_cast %125 : vector<8x8x8xf32> to vector<64x8xf32>
    %127 = arith.truncf %126 : vector<64x8xf32> to vector<64x8xbf16>
    %c0_102 = arith.constant 0 : index
    %c56 = arith.constant 56 : index
    %128 = vector.load %arg4[%c0_102, %c56] : memref<8x72xbf16, #tpu.memory_space<vmem>>, vector<8x8xbf16>
    %cst_103 = arith.constant dense<0.000000e+00> : vector<8x64xf32>
    %129 = tpu.matmul %128, %127, %cst_103 {dimension_numbers = #tpu.dot_dimension_numbers<[1], [1], [0], [0], [0, 0, 1, 0], [], []>} : vector<8x8xbf16>, vector<64x8xbf16>, vector<8x64xf32> -> vector<8x64xf32>
    %130 = arith.addf %124, %129 : vector<8x64xf32>
    %c2_104 = arith.constant 2 : index
    %c2_105 = arith.constant 2 : index
    %c0_106 = arith.constant 0 : index
    %131 = vector.load %arg8[%c2_104, %c2_105, %c0_106] : memref<10x10x8xf32, #tpu.memory_space<vmem>>, vector<8x8x8xf32>
    %132 = vector.shape_cast %131 : vector<8x8x8xf32> to vector<64x8xf32>
    %133 = arith.truncf %132 : vector<64x8xf32> to vector<64x8xbf16>
    %c0_107 = arith.constant 0 : index
    %c64 = arith.constant 64 : index
    %134 = vector.load %arg4[%c0_107, %c64] : memref<8x72xbf16, #tpu.memory_space<vmem>>, vector<8x8xbf16>
    %cst_108 = arith.constant dense<0.000000e+00> : vector<8x64xf32>
    %135 = tpu.matmul %134, %133, %cst_108 {dimension_numbers = #tpu.dot_dimension_numbers<[1], [1], [0], [0], [0, 0, 1, 0], [], []>} : vector<8x8xbf16>, vector<64x8xbf16>, vector<8x64xf32> -> vector<8x64xf32>
    %136 = arith.addf %130, %135 : vector<8x64xf32>
    %c0_109 = arith.constant 0 : index
    %c0_110 = arith.constant 0 : index
    %137 = vector.load %arg5[%c0_109, %c0_110] : memref<8x1xf32, #tpu.memory_space<vmem>>, vector<8x1xf32>
    %138 = vector.broadcast %137 : vector<8x1xf32> to vector<8x64xf32>
    %139 = arith.addf %136, %138 : vector<8x64xf32>
    %c0_111 = arith.constant 0 : index
    %c0_112 = arith.constant 0 : index
    %c0_113 = arith.constant 0 : index
    %140 = vector.load %arg6[%c0_111, %c0_112, %c0_113] : memref<1x4x64xf32, #tpu.memory_space<vmem>>, vector<1x4x64xf32>
    %141 = vector.shape_cast %140 : vector<1x4x64xf32> to vector<4x64xf32>
    %cst_114 = arith.constant 0.000000e+00 : f32
    %142 = vector.broadcast %cst_114 : f32 to vector<4x64xf32>
    %143 = tpu.concatenate %141, %142 in 0 : vector<4x64xf32>, vector<4x64xf32> -> vector<8x64xf32>
    %144 = arith.addf %139, %143 : vector<8x64xf32>
    %cst_115 = arith.constant 0.000000e+00 : f32
    %145 = vector.broadcast %cst_115 : f32 to vector<8x64xf32>
    %146 = arith.maximumf %144, %145 : vector<8x64xf32>
    %c0_116 = arith.constant 0 : index
    %c0_117 = arith.constant 0 : index
    %c0_118 = arith.constant 0 : index
    %147 = vector.load %arg7[%c0_116, %c0_117, %c0_118] : memref<1x8x64xf32, #tpu.memory_space<vmem>>, vector<1x8x64xf32>
    %148 = vector.shape_cast %147 : vector<1x8x64xf32> to vector<8x64xf32>
    %149 = vector.shape_cast %146 : vector<8x64xf32> to vector<1x8x64xf32>
    tpu.vector_store %arg7[%c0_116, %c0_117, %c0_118], %149 {strides = array<i32>} : memref<1x8x64xf32, #tpu.memory_space<vmem>>, vector<1x8x64xf32>,
    return
  }
  func.func @transform_0(%arg0: i32) -> (i32, i32, i32, i32) {
    %c0_i32 = arith.constant 0 : i32
    %c0_i32_0 = arith.constant 0 : i32
    %c0_i32_1 = arith.constant 0 : i32
    %c0_i32_2 = arith.constant 0 : i32
    return %arg0, %c0_i32, %c0_i32_0, %c0_i32_1 : i32, i32, i32, i32
  }
  func.func @transform_1(%arg0: i32) -> (i32, i32) {
    %c0_i32 = arith.constant 0 : i32
    %c0_i32_0 = arith.constant 0 : i32
    %c0_i32_1 = arith.constant 0 : i32
    return %c0_i32, %c0_i32_0 : i32, i32
  }
  func.func @transform_2(%arg0: i32) -> (i32, i32) {
    %c0_i32 = arith.constant 0 : i32
    %c0_i32_0 = arith.constant 0 : i32
    %c0_i32_1 = arith.constant 0 : i32
    return %c0_i32, %c0_i32_0 : i32, i32
  }
  func.func @transform_3(%arg0: i32) -> (i32, i32) {
    %c0_i32 = arith.constant 0 : i32
    %c0_i32_0 = arith.constant 0 : i32
    %c0_i32_1 = arith.constant 0 : i32
    return %c0_i32, %c0_i32_0 : i32, i32
  }
  func.func @transform_4(%arg0: i32) -> (i32, i32) {
    %c0_i32 = arith.constant 0 : i32
    %c0_i32_0 = arith.constant 0 : i32
    %c0_i32_1 = arith.constant 0 : i32
    return %c0_i32, %c0_i32_0 : i32, i32
  }
  func.func @transform_5(%arg0: i32) -> (i32, i32, i32) {
    %c0_i32 = arith.constant 0 : i32
    %c0_i32_0 = arith.constant 0 : i32
    %c0_i32_1 = arith.constant 0 : i32
    return %arg0, %c0_i32, %c0_i32_0 : i32, i32, i32
  }
  func.func @transform_6(%arg0: i32) -> (i32, i32, i32) {
    %c0_i32 = arith.constant 0 : i32
    %c0_i32_0 = arith.constant 0 : i32
    %c0_i32_1 = arith.constant 0 : i32
    return %arg0, %c0_i32, %c0_i32_0 : i32, i32, i32
  }
}

</mosaic_0001>

<llo_original>
// kernel: tpu_custom_call.1
$region0: #{tpu_custom_call.1}
  #allocation0 [shape = 'u32[]', space=smem, size = 0x4, offset = 0x4, fixed_abs, tag = 'smem constant byte address 0x4 - core index']
  #allocation1 [shape = 'u32[144,128]{1,0:T(1,128)}', space=vmem, size = 0x12000, scoped, tag = 'internal scratch']
  #allocation2 [shape = 'f32[10,10,8]{2,1,0:T(8,128)}', space=vmem, size = 0x14000, scoped, tag = 'scratch operand']
  %s0 = inlined_call_operand.vmem [shape: bf16[2,36,9,4], index: 0, kind: input, shape index: {}]
  %s1 = inlined_call_operand.vmem [shape: bf16[36,8], index: 1, kind: input, shape index: {}]
  %s2 = inlined_call_operand.vmem [shape: f32[1,8], index: 2, kind: input, shape index: {}]
  %s3 = inlined_call_operand.vmem [shape: bf16[8,72], index: 3, kind: input, shape index: {}]
  %s4 = inlined_call_operand.vmem [shape: f32[8,1], index: 4, kind: input, shape index: {}]
  %s5 = inlined_call_operand.vmem [shape: f32[2,4,64], index: 5, kind: input, shape index: {}]
  %s6 = inlined_call_operand.hbm [shape: f32[2,8,64], index: 6, kind: output, shape index: {}]
  %s7 = sld [smem:[#allocation0]]
  $region57: #{tpu_custom_call.1} parent=0
    _
  %s9 = ssub.s32 1, %s7
  %s10 = scalar_select 0, %s9, %s7
  $region1: #{tpu_custom_call.1} parent=0
    #allocation3 [shape = 'u8[8192]{0}', space=vmem, size = 0x2000, scoped, tag = 'output window, operand 0']
    #allocation4 [shape = 's32[2]{0}', space=sflag, size = 0x8, scoped, tag = 'scoped memory for tpu_custom_call.1']
    %11 = vsyncpa [#allocation4], 0
    %s12 = scalar_lea.sflag [#allocation4], 1
    %13 = vsyncpa %s12, 0
    loop: start=0, step=1, limit=4
    $region2: #{tpu_custom_call.1} parent=1 // loop_pre_header
      _
    $region3: #{tpu_custom_call.1} parent=1 // loop_header
      %s15 = sphi 0, %s19
      %p16 = scmp.ge.s32.totalorder %s15, 4
      %s25 = sphi 0, %s27
      %s28 = sphi 0, %s25
      %s29 = sphi 0, %s28
      %s45 = sphi 0, %s29
      %s49 = sphi 0, %s49
      %s51 = sphi 0, %s49
      %s52 = sphi 0, %s51
      %s66 = sphi 0, %s52
      %s70 = sphi 0, %s70
      %s72 = sphi 0, %s70
      %s73 = sphi 0, %s72
      %s87 = sphi 0, %s73
      %s91 = sphi 0, %s91
      %s93 = sphi 0, %s91
      %s94 = sphi 0, %s93
      %s108 = sphi 0, %s94
      %s112 = sphi 0, %s112
      %s114 = sphi 0, %s112
      %s115 = sphi 0, %s114
      %s129 = sphi 0, %s115
      %s135 = sphi 0, %s137
      %s138 = sphi 0, %s135
      %s139 = sphi 0, %s138
      %s155 = sphi 0, %s139
      %s161 = sphi 0, %s163
      %s164 = sphi 0, %s161
      %s165 = sphi 0, %s164
      %s181 = sphi 0, %s165
    $region4: #{tpu_custom_call.1} parent=1 // loop_header_branch
      %18 = sbr.rel (%p16) target = $region8
    $region5: #{tpu_custom_call.1} parent=1 // loop_body
      %s20 = ssub.s32 %s15, 1
      %s21 = ssub.s32 %s15, 2
      %s22 = sadd.s32 %s15, 1
      %s23 = ssub.s32 %s15, %s22
      %p24 = scmp.eq.s32.totalorder %s23, 0
      %s26 = sadd.s32 %s25, 1
      %s27 = scalar_select %p24, %s25, %s26
      %p30 = pneg %p24
      %p31 = scmp.eq.s32.totalorder %s15, 1
      %p32 = por %p30, %p31
      %p33 = scmp.ne.s32.totalorder %s25, %s28
      %p34 = scmp.eq.s32.totalorder %s15, 0
      %p35 = por %p33, %p34
      %p36 = scmp.ne.s32.totalorder %s25, %s28
      %p37 = scmp.eq.s32.totalorder %s20, 1
      %p38 = por %p36, %p37
      %p39 = scmp.ne.s32.totalorder %s28, %s29
      %p40 = scmp.eq.s32.totalorder %s20, 0
      %p41 = por %p39, %p40
      %p42 = scmp.ne.s32.totalorder %s28, %s29
      %p43 = scmp.eq.s32.totalorder %s21, 1
      %p44 = por %p42, %p43
      %p46 = scmp.ne.s32.totalorder %s29, %s45
      %p47 = scmp.eq.s32.totalorder %s21, 0
      %p48 = por %p46, %p47
      %s50 = sadd.s32 %s49, 1
      %p53 = scmp.eq.s32.totalorder %s15, 1
      %p54 = scmp.ne.s32.totalorder %s49, %s51
      %p55 = scmp.eq.s32.totalorder %s15, 0
      %p56 = por %p54, %p55
      %p57 = scmp.ne.s32.totalorder %s49, %s51
      %p58 = scmp.eq.s32.totalorder %s20, 1
      %p59 = por %p57, %p58
      %p60 = scmp.ne.s32.totalorder %s51, %s52
      %p61 = scmp.eq.s32.totalorder %s20, 0
      %p62 = por %p60, %p61
      %p63 = scmp.ne.s32.totalorder %s51, %s52
      %p64 = scmp.eq.s32.totalorder %s21, 1
      %p65 = por %p63, %p64
      %p67 = scmp.ne.s32.totalorder %s52, %s66
      %p68 = scmp.eq.s32.totalorder %s21, 0
      %p69 = por %p67, %p68
      %s71 = sadd.s32 %s70, 1
      %p74 = scmp.eq.s32.totalorder %s15, 1
      %p75 = scmp.ne.s32.totalorder %s70, %s72
      %p76 = scmp.eq.s32.totalorder %s15, 0
      %p77 = por %p75, %p76
      %p78 = scmp.ne.s32.totalorder %s70, %s72
      %p79 = scmp.eq.s32.totalorder %s20, 1
      %p80 = por %p78, %p79
      %p81 = scmp.ne.s32.totalorder %s72, %s73
      %p82 = scmp.eq.s32.totalorder %s20, 0
      %p83 = por %p81, %p82
      %p84 = scmp.ne.s32.totalorder %s72, %s73
      %p85 = scmp.eq.s32.totalorder %s21, 1
      %p86 = por %p84, %p85
      %p88 = scmp.ne.s32.totalorder %s73, %s87
      %p89 = scmp.eq.s32.totalorder %s21, 0
      %p90 = por %p88, %p89
      %s92 = sadd.s32 %s91, 1
      %p95 = scmp.eq.s32.totalorder %s15, 1
      %p96 = scmp.ne.s32.totalorder %s91, %s93
      %p97 = scmp.eq.s32.totalorder %s15, 0
      %p98 = por %p96, %p97
      %p99 = scmp.ne.s32.totalorder %s91, %s93
      %p100 = scmp.eq.s32.totalorder %s20, 1
      %p101 = por %p99, %p100
      %p102 = scmp.ne.s32.totalorder %s93, %s94
      %p103 = scmp.eq.s32.totalorder %s20, 0
      %p104 = por %p102, %p103
      %p105 = scmp.ne.s32.totalorder %s93, %s94
      %p106 = scmp.eq.s32.totalorder %s21, 1
      %p107 = por %p105, %p106
      %p109 = scmp.ne.s32.totalorder %s94, %s108
      %p110 = scmp.eq.s32.totalorder %s21, 0
      %p111 = por %p109, %p110
      %s113 = sadd.s32 %s112, 1
      %p116 = scmp.eq.s32.totalorder %s15, 1
      %p117 = scmp.ne.s32.totalorder %s112, %s114
      %p118 = scmp.eq.s32.totalorder %s15, 0
      %p119 = por %p117, %p118
      %p120 = scmp.ne.s32.totalorder %s112, %s114
      %p121 = scmp.eq.s32.totalorder %s20, 1
      %p122 = por %p120, %p121
      %p123 = scmp.ne.s32.totalorder %s114, %s115
      %p124 = scmp.eq.s32.totalorder %s20, 0
      %p125 = por %p123, %p124
      %p126 = scmp.ne.s32.totalorder %s114, %s115
      %p127 = scmp.eq.s32.totalorder %s21, 1
      %p128 = por %p126, %p127
      %p130 = scmp.ne.s32.totalorder %s115, %s129
      %p131 = scmp.eq.s32.totalorder %s21, 0
      %p132 = por %p130, %p131
      %s133 = ssub.s32 %s15, %s22
      %p134 = scmp.eq.s32.totalorder %s133, 0
      %s136 = sadd.s32 %s135, 1
      %s137 = scalar_select %p134, %s135, %s136
      %p140 = pneg %p134
      %p141 = scmp.eq.s32.totalorder %s15, 1
      %p142 = por %p140, %p141
      %p143 = scmp.ne.s32.totalorder %s135, %s138
      %p144 = scmp.eq.s32.totalorder %s15, 0
      %p145 = por %p143, %p144
      %p146 = scmp.ne.s32.totalorder %s135, %s138
      %p147 = scmp.eq.s32.totalorder %s20, 1
      %p148 = por %p146, %p147
      %p149 = scmp.ne.s32.totalorder %s138, %s139
      %p150 = scmp.eq.s32.totalorder %s20, 0
      %p151 = por %p149, %p150
      %p152 = scmp.ne.s32.totalorder %s138, %s139
      %p153 = scmp.eq.s32.totalorder %s21, 1
      %p154 = por %p152, %p153
      %p156 = scmp.ne.s32.totalorder %s139, %s155
      %p157 = scmp.eq.s32.totalorder %s21, 0
      %p158 = por %p156, %p157
      %s159 = ssub.s32 %s15, %s22
      %p160 = scmp.eq.s32.totalorder %s159, 0
      %s162 = sadd.s32 %s161, 1
      %s163 = scalar_select %p160, %s161, %s162
      %p166 = pneg %p160
      %p167 = scmp.eq.s32.totalorder %s15, 1
      %p168 = por %p166, %p167
      %p169 = scmp.ne.s32.totalorder %s161, %s164
      %p170 = scmp.eq.s32.totalorder %s15, 0
      %p171 = por %p169, %p170
      %p172 = scmp.ne.s32.totalorder %s161, %s164
      %p173 = scmp.eq.s32.totalorder %s20, 1
      %p174 = por %p172, %p173
      %p175 = scmp.ne.s32.totalorder %s164, %s165
      %p176 = scmp.eq.s32.totalorder %s20, 0
      %p177 = por %p175, %p176
      %p178 = scmp.ne.s32.totalorder %s164, %s165
      %p179 = scmp.eq.s32.totalorder %s21, 1
      %p180 = por %p178, %p179
      %p182 = scmp.ne.s32.totalorder %s165, %s181
      %p183 = scmp.eq.s32.totalorder %s21, 0
      %p184 = por %p182, %p183
      %p185 = scmp.le.s32.totalorder 1, %s15
      %p186 = scmp.lt.s32.totalorder %s15, 3
      %p187 = pnand %p185, %p186
      %p188 = pneg %p187
      // Predicated region
      $region9: #{tpu_custom_call.1} parent=5 // pred_check
        _
      $region10: #{tpu_custom_call.1} parent=5 // pred_check_branch
        %190 = sbr.rel (%p187) target = $region12
      $region11: #{tpu_custom_call.1} parent=5 // pred_region
        %s191 = ssub.s32 %s15, 1
        // Predicated region
        $region13: #{tpu_custom_call.1} parent=11 // pred_check
          %p192 = pneg %p62
        $region14: #{tpu_custom_call.1} parent=11 // pred_check_branch
          %194 = sbr.rel (%p192) target = $region16
        $region15: #{tpu_custom_call.1} parent=11 // pred_region
          _
        $region16: #{tpu_custom_call.1} parent=11 // pred_fallthru
          _
        // Predicated region
        $region17: #{tpu_custom_call.1} parent=11 // pred_check
          %p195 = pneg %p83
        $region18: #{tpu_custom_call.1} parent=11 // pred_check_branch
          %197 = sbr.rel (%p195) target = $region20
        $region19: #{tpu_custom_call.1} parent=11 // pred_region
          _
        $region20: #{tpu_custom_call.1} parent=11 // pred_fallthru
          _
        // Predicated region
        $region21: #{tpu_custom_call.1} parent=11 // pred_check
          %p198 = pneg %p104
        $region22: #{tpu_custom_call.1} parent=11 // pred_check_branch
          %200 = sbr.rel (%p198) target = $region24
        $region23: #{tpu_custom_call.1} parent=11 // pred_region
          _
        $region24: #{tpu_custom_call.1} parent=11 // pred_fallthru
          _
        // Predicated region
        $region25: #{tpu_custom_call.1} parent=11 // pred_check
          %p201 = pneg %p125
        $region26: #{tpu_custom_call.1} parent=11 // pred_check_branch
          %203 = sbr.rel (%p201) target = $region28
        $region27: #{tpu_custom_call.1} parent=11 // pred_region
          _
        $region28: #{tpu_custom_call.1} parent=11 // pred_fallthru
          _
      $region12: #{tpu_custom_call.1} parent=5 // pred_fallthru
        _
      %p204 = scmp.lt.s32.totalorder %s15, 2
      // Predicated region
      $region29: #{tpu_custom_call.1} parent=5 // pred_check
        %p205 = pneg %p204
      $region30: #{tpu_custom_call.1} parent=5 // pred_check_branch
        %207 = sbr.rel (%p205) target = $region32
      $region31: #{tpu_custom_call.1} parent=5 // pred_region
        // Predicated region
        $region33: #{tpu_custom_call.1} parent=31 // pred_check
          %p208 = pneg %p35
        $region34: #{tpu_custom_call.1} parent=31 // pred_check_branch
          %210 = sbr.rel (%p208) target = $region36
        $region35: #{tpu_custom_call.1} parent=31 // pred_region
          %p211 = scmp.lt.s32.totalorder %s15, 1
          %s212 = scalar_select %p211, %s15, 1
          %s213 = smul.addr %s212, 72
          %s214 = smul.addr %s213, 4
          %s215 = scalar_lea.vmem %s0, %s214
        $region36: #{tpu_custom_call.1} parent=31 // pred_fallthru
          _
        // Predicated region
        $region37: #{tpu_custom_call.1} parent=31 // pred_check
          %p216 = pneg %p145
        $region38: #{tpu_custom_call.1} parent=31 // pred_check_branch
          %218 = sbr.rel (%p216) target = $region40
        $region39: #{tpu_custom_call.1} parent=31 // pred_region
          %p219 = scmp.lt.s32.totalorder %s15, 1
          %s220 = scalar_select %p219, %s15, 1
          %s221 = smul.addr %s220, 4
          %s222 = scalar_lea.vmem %s5, %s221
        $region40: #{tpu_custom_call.1} parent=31 // pred_fallthru
          _
      $region32: #{tpu_custom_call.1} parent=5 // pred_fallthru
        _
      %p223 = scmp.le.s32.totalorder 1, %s15
      %p224 = scmp.lt.s32.totalorder %s15, 3
      %p225 = pnand %p223, %p224
      %p226 = pneg %p225
      // Predicated region
      $region41: #{tpu_custom_call.1} parent=5 // pred_check
        _
      $region42: #{tpu_custom_call.1} parent=5 // pred_check_branch
        %228 = sbr.rel (%p225) target = $region44
      $region43: #{tpu_custom_call.1} parent=5 // pred_region
        %s229 = ssub.s32 %s15, 1
        %p230 = scmp.lt.s32.totalorder %s20, 1
        %s231 = scalar_select %p230, %s20, 1
        %s232 = smul.addr %s231, 72
        %s233 = smul.addr %s232, 4
        %s234 = scalar_lea.vmem %s0, %s233
        %p235 = pneg %p41
        %p236 = pneg %p38
        %p237 = pneg %p62
        %p238 = pneg %p59
        %p239 = pneg %p83
        %p240 = pneg %p80
        %p241 = pneg %p104
        %p242 = pneg %p101
        %p243 = pneg %p125
        %p244 = pneg %p122
        %p245 = scmp.lt.s32.totalorder %s20, 1
        %s246 = scalar_select %p245, %s20, 1
        %s247 = smul.addr %s246, 4
        %s248 = scalar_lea.vmem %s5, %s247
        %p249 = pneg %p151
        %p250 = pneg %p148
        %p251 = pneg %p177
        %p252 = pneg %p174
        %s253 = sand.u32 %s164, 1
        %s254 = scalar_lea.sflag [#allocation4], %s253
        %s255 = sand.u32 %s164, 1
        %s256 = smul.addr %s255, 8
        %s257 = scalar_lea.vmem [#allocation3], %s256
        %p258 = scmp.lt.s32.totalorder %s20, 1
        %s259 = scalar_select %p258, %s20, 1
        %s260 = smul.addr %s259, 72
        %s261 = smul.addr %s260, 4
        %s262 = scalar_lea.vmem %s0, %s261
        %p263 = scmp.lt.s32.totalorder %s20, 1
        %s264 = scalar_select %p263, %s20, 1
        %s265 = smul.addr %s264, 4
        %s266 = scalar_lea.vmem %s5, %s265
        %v268 = vld [vmem:[%s262] sm:$0xf]
        %v269 = vld [vmem:[%s262 + $0x8] sm:$0xf]
        %v270 = vld [vmem:[%s262 + $0x10] sm:$0xf]
        %v271 = vld [vmem:[%s262 + $0x18] sm:$0xf]
        %v272 = vld [vmem:[%s262 + $0x20] sm:$0xf]
        %v273 = vld [vmem:[%s262 + $0x28] sm:$0xf]
        %v274 = vld [vmem:[%s262 + $0x30] sm:$0xf]
        %v275 = vld [vmem:[%s262 + $0x38] sm:$0xf]
        %v276 = vunpack.c.l.bf16 %v268
        %v277 = vunpack.c.l.bf16 %v269
        %v278 = vunpack.c.l.bf16 %v270
        %v279 = vunpack.c.l.bf16 %v271
        %v280 = vunpack.c.l.bf16 %v272
        %v281 = vunpack.c.l.bf16 %v273
        %v282 = vunpack.c.l.bf16 %v274
        %v283 = vunpack.c.l.bf16 %v275
        %v284 = vpack.c.bf16 %v277, %v276
        %v285 = vpack.c.bf16 %v279, %v278
        %v286 = vpack.c.bf16 %v281, %v280
        %v287 = vpack.c.bf16 %v283, %v282
        %v288 = vld [vmem:[%s1] sm:$0x3]
        %s289 = scalar_lea.vmem %s262, 72
        %v290 = vld [vmem:[%s289] sm:$0xf]
        %v291 = vld [vmem:[%s289 + $0x8] sm:$0xf]
        %v292 = vld [vmem:[%s289 + $0x10] sm:$0xf]
        %v293 = vld [vmem:[%s289 + $0x18] sm:$0xf]
        %v294 = vld [vmem:[%s289 + $0x20] sm:$0xf]
        %v295 = vld [vmem:[%s289 + $0x28] sm:$0xf]
        %v296 = vld [vmem:[%s289 + $0x30] sm:$0xf]
        %v297 = vld [vmem:[%s289 + $0x38] sm:$0xf]
        %v298 = vunpack.c.l.bf16 %v290
        %v299 = vunpack.c.l.bf16 %v291
        %v300 = vunpack.c.l.bf16 %v292
        %v301 = vunpack.c.l.bf16 %v293
        %v302 = vunpack.c.l.bf16 %v294
        %v303 = vunpack.c.l.bf16 %v295
        %v304 = vunpack.c.l.bf16 %v296
        %v305 = vunpack.c.l.bf16 %v297
        %v306 = vpack.c.bf16 %v299, %v298
        %v307 = vpack.c.bf16 %v301, %v300
        %v308 = vpack.c.bf16 %v303, %v302
        %v309 = vpack.c.bf16 %v305, %v304
        %v310 = vld [vmem:[%s1] sm:$0xc]
        %v312 = vunpack.c.l.b16 %v310
        %v313 = vpack.c.b16 %v312, %v312
        %v314 = vrot.slane %v313, 2
        %vm315 = vcmask 31744
        %v317 = vsel %vm315, %v306, 0
        %v320 = vsel %vm315, %v307, 0
        %v323 = vsel %vm315, %v308, 0
        %v326 = vsel %vm315, %v309, 0
        %vm328 = vcmask 1041408
        %v330 = vsel %vm328, %v314, 0
        %332 = vmatprep.subr.bf16.mxu0 0
        %333 = vmatpush1.bf16.msra.mxu0 %v330
        %334 = vmatprep.subr.bf16.mxu0 0
        %335 = vmatpush1.bf16.msra.mxu0 0
        %336 = vmatprep.subr.bf16.mxu0 0
        %337 = vmatpush1.bf16.msra.mxu0 0
        %338 = vmatprep.subr.bf16.mxu0 0
        %339 = vmatpush1.bf16.msra.mxu0 0
        %340 = vmatprep.subr.bf16.mxu0 0
        %341 = vmatpush1.bf16.msra.mxu0 0
        %342 = vmatprep.subr.bf16.mxu0 0
        %343 = vmatpush1.bf16.msra.mxu0 0
        %344 = vmatprep.subr.bf16.mxu0 0
        %345 = vmatpush1.bf16.msra.mxu0 0
        %346 = vmatprep.subr.bf16.mxu0 0
        %347 = vmatpush1.bf16.msra.mxu0 0
        %348 = vmatprep.subr.bf16.mxu0 0
        %349 = vmatpush1.bf16.msra.mxu0 0
        %350 = vmatprep.subr.bf16.mxu0 0
        %351 = vmatpush1.bf16.msra.mxu0 0
        %352 = vmatprep.subr.bf16.mxu0 0
        %353 = vmatpush1.bf16.msra.mxu0 0
        %354 = vmatprep.subr.bf16.mxu0 0
        %355 = vmatpush1.bf16.msra.mxu0 0
        %356 = vmatprep.subr.bf16.mxu0 0
        %357 = vmatpush1.bf16.msra.mxu0 0
        %358 = vmatprep.subr.bf16.mxu0 0
        %359 = vmatpush1.bf16.msra.mxu0 0
        %360 = vmatprep.subr.bf16.mxu0 0
        %361 = vmatpush1.bf16.msra.mxu0 0
        %362 = vmatprep.subr.bf16.mxu0 0
        %363 = vmatpush1.bf16.msra.mxu0 0
        %364 = vmatprep.mubr.bf16.mxu0 0
        %365 = vmatmul.mubr.bf16.gmra.mrb[0].mxu0 %v317
        %v366 = vpop.f32.mrb[0].mxu0
        %v367 = vadd.f32 0.0, %v366
        %v368 = vpop.f32.mrb[0].mxu0
        %v369 = vpop.f32.mrb[0].mxu0
        %v370 = vadd.f32 0.0, %v369
        %v371 = vpop.f32.mrb[0].mxu0
        %372 = vmatprep.mubr.bf16.mxu0 0
        %373 = vmatmul.mubr.bf16.gmra.mrb[0].mxu0 %v320
        %v374 = vpop.f32.mrb[0].mxu0
        %v375 = vadd.f32 0.0, %v374
        %v376 = vpop.f32.mrb[0].mxu0
        %v377 = vpop.f32.mrb[0].mxu0
        %v378 = vadd.f32 0.0, %v377
        %v379 = vpop.f32.mrb[0].mxu0
        %380 = vmatprep.mubr.bf16.mxu0 0
        %381 = vmatmul.mubr.bf16.gmra.mrb[0].mxu0 %v323
        %v382 = vpop.f32.mrb[0].mxu0
        %v383 = vadd.f32 0.0, %v382
        %v384 = vpop.f32.mrb[0].mxu0
        %v385 = vpop.f32.mrb[0].mxu0
        %v386 = vadd.f32 0.0, %v385
        %v387 = vpop.f32.mrb[0].mxu0
        %388 = vmatprep.mubr.bf16.mxu0 0
        %389 = vmatmul.mubr.bf16.gmra.mrb[0].mxu0 %v326
        %v390 = vpop.f32.mrb[0].mxu0
        %v391 = vadd.f32 0.0, %v390
        %v392 = vpop.f32.mrb[0].mxu0
        %v393 = vpop.f32.mrb[0].mxu0
        %v394 = vadd.f32 0.0, %v393
        %v395 = vpop.f32.mrb[0].mxu0
        %396 = vdwg.mxu0
        %v398 = vsel %vm315, %v284, 0
        %v401 = vsel %vm315, %v285, 0
        %v404 = vsel %vm315, %v286, 0
        %v407 = vsel %vm315, %v287, 0
        %v410 = vsel %vm328, %v288, 0
        %412 = vmatprep.subr.bf16.mxu0 0
        %413 = vmatpush1.bf16.msra.mxu0 %v410
        %414 = vmatprep.subr.bf16.mxu0 0
        %415 = vmatpush1.bf16.msra.mxu0 0
        %416 = vmatprep.subr.bf16.mxu0 0
        %417 = vmatpush1.bf16.msra.mxu0 0
        %418 = vmatprep.subr.bf16.mxu0 0
        %419 = vmatpush1.bf16.msra.mxu0 0
        %420 = vmatprep.subr.bf16.mxu0 0
        %421 = vmatpush1.bf16.msra.mxu0 0
        %422 = vmatprep.subr.bf16.mxu0 0
        %423 = vmatpush1.bf16.msra.mxu0 0
        %424 = vmatprep.subr.bf16.mxu0 0
        %425 = vmatpush1.bf16.msra.mxu0 0
        %426 = vmatprep.subr.bf16.mxu0 0
        %427 = vmatpush1.bf16.msra.mxu0 0
        %428 = vmatprep.subr.bf16.mxu0 0
        %429 = vmatpush1.bf16.msra.mxu0 0
        %430 = vmatprep.subr.bf16.mxu0 0
        %431 = vmatpush1.bf16.msra.mxu0 0
        %432 = vmatprep.subr.bf16.mxu0 0
        %433 = vmatpush1.bf16.msra.mxu0 0
        %434 = vmatprep.subr.bf16.mxu0 0
        %435 = vmatpush1.bf16.msra.mxu0 0
        %436 = vmatprep.subr.bf16.mxu0 0
        %437 = vmatpush1.bf16.msra.mxu0 0
        %438 = vmatprep.subr.bf16.mxu0 0
        %439 = vmatpush1.bf16.msra.mxu0 0
        %440 = vmatprep.subr.bf16.mxu0 0
        %441 = vmatpush1.bf16.msra.mxu0 0
        %442 = vmatprep.subr.bf16.mxu0 0
        %443 = vmatpush1.bf16.msra.mxu0 0
        %444 = vmatprep.mubr.bf16.mxu0 0
        %445 = vmatmul.mubr.bf16.gmra.mrb[0].mxu0 %v398
        %v446 = vpop.f32.mrb[0].mxu0
        %v447 = vadd.f32 %v367, %v446
        %v448 = vpop.f32.mrb[0].mxu0
        %v449 = vpop.f32.mrb[0].mxu0
        %v450 = vadd.f32 %v370, %v449
        %v451 = vpop.f32.mrb[0].mxu0
        %452 = vmatprep.mubr.bf16.mxu0 0
        %453 = vmatmul.mubr.bf16.gmra.mrb[0].mxu0 %v401
        %v454 = vpop.f32.mrb[0].mxu0
        %v455 = vadd.f32 %v375, %v454
        %v456 = vpop.f32.mrb[0].mxu0
        %v457 = vpop.f32.mrb[0].mxu0
        %v458 = vadd.f32 %v378, %v457
        %v459 = vpop.f32.mrb[0].mxu0
        %460 = vmatprep.mubr.bf16.mxu0 0
        %461 = vmatmul.mubr.bf16.gmra.mrb[0].mxu0 %v404
        %v462 = vpop.f32.mrb[0].mxu0
        %v463 = vadd.f32 %v383, %v462
        %v464 = vpop.f32.mrb[0].mxu0
        %v465 = vpop.f32.mrb[0].mxu0
        %v466 = vadd.f32 %v386, %v465
        %v467 = vpop.f32.mrb[0].mxu0
        %468 = vmatprep.mubr.bf16.mxu0 0
        %469 = vmatmul.mubr.bf16.gmra.mrb[0].mxu0 %v407
        %v470 = vpop.f32.mrb[0].mxu0
        %v471 = vadd.f32 %v391, %v470
        %v472 = vpop.f32.mrb[0].mxu0
        %v473 = vpop.f32.mrb[0].mxu0
        %v474 = vadd.f32 %v394, %v473
        %v475 = vpop.f32.mrb[0].mxu0
        %476 = vdwg.mxu0
        %v477 = vld [vmem:[%s262] sm:$0xf]
        %v478 = vld [vmem:[%s262 + $0x4] sm:$0x1]
        %v479 = vld [vmem:[%s262 + $0x8] sm:$0xf]
        %v480 = vld [vmem:[%s262 + $0xc] sm:$0x1]
        %v481 = vld [vmem:[%s262 + $0x10] sm:$0xf]
        %v482 = vld [vmem:[%s262 + $0x14] sm:$0x1]
        %v483 = vld [vmem:[%s262 + $0x18] sm:$0xf]
        %v484 = vld [vmem:[%s262 + $0x1c] sm:$0x1]
        %v485 = vld [vmem:[%s262 + $0x20] sm:$0xf]
        %v486 = vld [vmem:[%s262 + $0x24] sm:$0x1]
        %v487 = vld [vmem:[%s262 + $0x28] sm:$0xf]
        %v488 = vld [vmem:[%s262 + $0x2c] sm:$0x1]
        %v489 = vld [vmem:[%s262 + $0x30] sm:$0xf]
        %v490 = vld [vmem:[%s262 + $0x34] sm:$0x1]
        %v491 = vld [vmem:[%s262 + $0x38] sm:$0xf]
        %v492 = vld [vmem:[%s262 + $0x3c] sm:$0x1]
        %v493 = vunpack.c.l.bf16 %v477
        %v494 = vunpack.c.l.bf16 %v478
        %v495 = vunpack.c.l.bf16 %v479
        %v496 = vunpack.c.l.bf16 %v480
        %v497 = vunpack.c.l.bf16 %v481
        %v498 = vunpack.c.l.bf16 %v482
        %v499 = vunpack.c.l.bf16 %v483
        %v500 = vunpack.c.l.bf16 %v484
        %v501 = vunpack.c.l.bf16 %v485
        %v502 = vunpack.c.l.bf16 %v486
        %v503 = vunpack.c.l.bf16 %v487
        %v504 = vunpack.c.l.bf16 %v488
        %v505 = vunpack.c.l.bf16 %v489
        %v506 = vunpack.c.l.bf16 %v490
        %v507 = vunpack.c.l.bf16 %v491
        %v508 = vunpack.c.l.bf16 %v492
        %vm525 = vcmask 1046528
        %v526 = vrot.slane %v493, 1
        %v527 = vrot.slane %v494, 1
        %v528 = vsel %vm525, %v526, %v527
        %v529 = vrot.slane %v495, 1
        %v530 = vrot.slane %v496, 1
        %v531 = vsel %vm525, %v529, %v530
        %v532 = vrot.slane %v497, 1
        %v533 = vrot.slane %v498, 1
        %v534 = vsel %vm525, %v532, %v533
        %v535 = vrot.slane %v499, 1
        %v536 = vrot.slane %v500, 1
        %v537 = vsel %vm525, %v535, %v536
        %v538 = vrot.slane %v501, 1
        %v539 = vrot.slane %v502, 1
        %v540 = vsel %vm525, %v538, %v539
        %v541 = vrot.slane %v503, 1
        %v542 = vrot.slane %v504, 1
        %v543 = vsel %vm525, %v541, %v542
        %v544 = vrot.slane %v505, 1
        %v545 = vrot.slane %v506, 1
        %v546 = vsel %vm525, %v544, %v545
        %v547 = vrot.slane %v507, 1
        %v548 = vrot.slane %v508, 1
        %v549 = vsel %vm525, %v547, %v548
        %v558 = vpack.c.bf16 %v531, %v528
        %v559 = vpack.c.bf16 %v537, %v534
        %v560 = vpack.c.bf16 %v543, %v540
        %v561 = vpack.c.bf16 %v549, %v546
        %v562 = vld [vmem:[%s1 + $0x4] sm:$0x3]
        %v564 = vsel %vm315, %v558, 0
        %v567 = vsel %vm315, %v559, 0
        %v570 = vsel %vm315, %v560, 0
        %v573 = vsel %vm315, %v561, 0
        %v576 = vsel %vm328, %v562, 0
        %578 = vmatprep.subr.bf16.mxu0 0
        %579 = vmatpush1.bf16.msra.mxu0 %v576
        %580 = vmatprep.subr.bf16.mxu0 0
        %581 = vmatpush1.bf16.msra.mxu0 0
        %582 = vmatprep.subr.bf16.mxu0 0
        %583 = vmatpush1.bf16.msra.mxu0 0
        %584 = vmatprep.subr.bf16.mxu0 0
        %585 = vmatpush1.bf16.msra.mxu0 0
        %586 = vmatprep.subr.bf16.mxu0 0
        %587 = vmatpush1.bf16.msra.mxu0 0
        %588 = vmatprep.subr.bf16.mxu0 0
        %589 = vmatpush1.bf16.msra.mxu0 0
        %590 = vmatprep.subr.bf16.mxu0 0
        %591 = vmatpush1.bf16.msra.mxu0 0
        %592 = vmatprep.subr.bf16.mxu0 0
        %593 = vmatpush1.bf16.msra.mxu0 0
        %594 = vmatprep.subr.bf16.mxu0 0
        %595 = vmatpush1.bf16.msra.mxu0 0
        %596 = vmatprep.subr.bf16.mxu0 0
        %597 = vmatpush1.bf16.msra.mxu0 0
        %598 = vmatprep.subr.bf16.mxu0 0
        %599 = vmatpush1.bf16.msra.mxu0 0
        %600 = vmatprep.subr.bf16.mxu0 0
        %601 = vmatpush1.bf16.msra.mxu0 0
        %602 = vmatprep.subr.bf16.mxu0 0
        %603 = vmatpush1.bf16.msra.mxu0 0
        %604 = vmatprep.subr.bf16.mxu0 0
        %605 = vmatpush1.bf16.msra.mxu0 0
        %606 = vmatprep.subr.bf16.mxu0 0
        %607 = vmatpush1.bf16.msra.mxu0 0
        %608 = vmatprep.subr.bf16.mxu0 0
        %609 = vmatpush1.bf16.msra.mxu0 0
        %610 = vmatprep.mubr.bf16.mxu0 0
        %611 = vmatmul.mubr.bf16.gmra.mrb[0].mxu0 %v564
        %v612 = vpop.f32.mrb[0].mxu0
        %v613 = vadd.f32 0.0, %v612
        %v614 = vpop.f32.mrb[0].mxu0
        %v615 = vpop.f32.mrb[0].mxu0
        %v616 = vadd.f32 0.0, %v615
        %v617 = vpop.f32.mrb[0].mxu0
        %618 = vmatprep.mubr.bf16.mxu0 0
        %619 = vmatmul.mubr.bf16.gmra.mrb[0].mxu0 %v567
        %v620 = vpop.f32.mrb[0].mxu0
        %v621 = vadd.f32 0.0, %v620
        %v622 = vpop.f32.mrb[0].mxu0
        %v623 = vpop.f32.mrb[0].mxu0
        %v624 = vadd.f32 0.0, %v623
        %v625 = vpop.f32.mrb[0].mxu0
        %626 = vmatprep.mubr.bf16.mxu0 0
        %627 = vmatmul.mubr.bf16.gmra.mrb[0].mxu0 %v570
        %v628 = vpop.f32.mrb[0].mxu0
        %v629 = vadd.f32 0.0, %v628
        %v630 = vpop.f32.mrb[0].mxu0
        %v631 = vpop.f32.mrb[0].mxu0
        %v632 = vadd.f32 0.0, %v631
        %v633 = vpop.f32.mrb[0].mxu0
        %634 = vmatprep.mubr.bf16.mxu0 0
        %635 = vmatmul.mubr.bf16.gmra.mrb[0].mxu0 %v573
        %v636 = vpop.f32.mrb[0].mxu0
        %v637 = vadd.f32 0.0, %v636
        %v638 = vpop.f32.mrb[0].mxu0
        %v639 = vpop.f32.mrb[0].mxu0
        %v640 = vadd.f32 0.0, %v639
        %v641 = vpop.f32.mrb[0].mxu0
        %642 = vdwg.mxu0
        %v643 = vadd.f32 %v447, %v613
        %v644 = vadd.f32 %v450, %v616
        %v645 = vadd.f32 %v455, %v621
        %v646 = vadd.f32 %v458, %v624
        %v647 = vadd.f32 %v463, %v629
        %v648 = vadd.f32 %v466, %v632
        %v649 = vadd.f32 %v471, %v637
        %v650 = vadd.f32 %v474, %v640
        %s651 = scalar_lea.vmem %s262, 144
        %v652 = vld [vmem:[%s651] sm:$0xf]
        %v653 = vld [vmem:[%s651 + $0x8] sm:$0xf]
        %v654 = vld [vmem:[%s651 + $0x10] sm:$0xf]
        %v655 = vld [vmem:[%s651 + $0x18] sm:$0xf]
        %v656 = vld [vmem:[%s651 + $0x20] sm:$0xf]
        %v657 = vld [vmem:[%s651 + $0x28] sm:$0xf]
        %v658 = vld [vmem:[%s651 + $0x30] sm:$0xf]
        %v659 = vld [vmem:[%s651 + $0x38] sm:$0xf]
        %v660 = vunpack.c.l.bf16 %v652
        %v661 = vunpack.c.l.bf16 %v653
        %v662 = vunpack.c.l.bf16 %v654
        %v663 = vunpack.c.l.bf16 %v655
        %v664 = vunpack.c.l.bf16 %v656
        %v665 = vunpack.c.l.bf16 %v657
        %v666 = vunpack.c.l.bf16 %v658
        %v667 = vunpack.c.l.bf16 %v659
        %v668 = vpack.c.bf16 %v661, %v660
        %v669 = vpack.c.bf16 %v663, %v662
        %v670 = vpack.c.bf16 %v665, %v664
        %v671 = vpack.c.bf16 %v667, %v666
        %v672 = vld [vmem:[%s1 + $0x4] sm:$0xc]
        %v674 = vunpack.c.l.b16 %v672
        %v675 = vpack.c.b16 %v674, %v674
        %v676 = vrot.slane %v675, 2
        %v678 = vsel %vm315, %v668, 0
        %v681 = vsel %vm315, %v669, 0
        %v684 = vsel %vm315, %v670, 0
        %v687 = vsel %vm315, %v671, 0
        %v690 = vsel %vm328, %v676, 0
        %692 = vmatprep.subr.bf16.mxu0 0
        %693 = vmatpush1.bf16.msra.mxu0 %v690
        %694 = vmatprep.subr.bf16.mxu0 0
        %695 = vmatpush1.bf16.msra.mxu0 0
        %696 = vmatprep.subr.bf16.mxu0 0
        %697 = vmatpush1.bf16.msra.mxu0 0
        %698 = vmatprep.subr.bf16.mxu0 0
        %699 = vmatpush1.bf16.msra.mxu0 0
        %700 = vmatprep.subr.bf16.mxu0 0
        %701 = vmatpush1.bf16.msra.mxu0 0
        %702 = vmatprep.subr.bf16.mxu0 0
        %703 = vmatpush1.bf16.msra.mxu0 0
        %704 = vmatprep.subr.bf16.mxu0 0
        %705 = vmatpush1.bf16.msra.mxu0 0
        %706 = vmatprep.subr.bf16.mxu0 0
        %707 = vmatpush1.bf16.msra.mxu0 0
        %708 = vmatprep.subr.bf16.mxu0 0
        %709 = vmatpush1.bf16.msra.mxu0 0
        %710 = vmatprep.subr.bf16.mxu0 0
        %711 = vmatpush1.bf16.msra.mxu0 0
        %712 = vmatprep.subr.bf16.mxu0 0
        %713 = vmatpush1.bf16.msra.mxu0 0
        %714 = vmatprep.subr.bf16.mxu0 0
        %715 = vmatpush1.bf16.msra.mxu0 0
        %716 = vmatprep.subr.bf16.mxu0 0
        %717 = vmatpush1.bf16.msra.mxu0 0
        %718 = vmatprep.subr.bf16.mxu0 0
        %719 = vmatpush1.bf16.msra.mxu0 0
        %720 = vmatprep.subr.bf16.mxu0 0
        %721 = vmatpush1.bf16.msra.mxu0 0
        %722 = vmatprep.subr.bf16.mxu0 0
        %723 = vmatpush1.bf16.msra.mxu0 0
        %724 = vmatprep.mubr.bf16.mxu0 0
        %725 = vmatmul.mubr.bf16.gmra.mrb[0].mxu0 %v678
        %v726 = vpop.f32.mrb[0].mxu0
        %v727 = vadd.f32 0.0, %v726
        %v728 = vpop.f32.mrb[0].mxu0
        %v729 = vpop.f32.mrb[0].mxu0
        %v730 = vadd.f32 0.0, %v729
        %v731 = vpop.f32.mrb[0].mxu0
        %732 = vmatprep.mubr.bf16.mxu0 0
        %733 = vmatmul.mubr.bf16.gmra.mrb[0].mxu0 %v681
        %v734 = vpop.f32.mrb[0].mxu0
        %v735 = vadd.f32 0.0, %v734
        %v736 = vpop.f32.mrb[0].mxu0
        %v737 = vpop.f32.mrb[0].mxu0
        %v738 = vadd.f32 0.0, %v737
        %v739 = vpop.f32.mrb[0].mxu0
        %740 = vmatprep.mubr.bf16.mxu0 0
        %741 = vmatmul.mubr.bf16.gmra.mrb[0].mxu0 %v684
        %v742 = vpop.f32.mrb[0].mxu0
        %v743 = vadd.f32 0.0, %v742
        %v744 = vpop.f32.mrb[0].mxu0
        %v745 = vpop.f32.mrb[0].mxu0
        %v746 = vadd.f32 0.0, %v745
        %v747 = vpop.f32.mrb[0].mxu0
        %748 = vmatprep.mubr.bf16.mxu0 0
        %749 = vmatmul.mubr.bf16.gmra.mrb[0].mxu0 %v687
        %v750 = vpop.f32.mrb[0].mxu0
        %v751 = vadd.f32 0.0, %v750
        %v752 = vpop.f32.mrb[0].mxu0
        %v753 = vpop.f32.mrb[0].mxu0
        %v754 = vadd.f32 0.0, %v753
        %v755 = vpop.f32.mrb[0].mxu0
        %756 = vdwg.mxu0
        %v757 = vadd.f32 %v643, %v727
        %v758 = vadd.f32 %v644, %v730
        %v759 = vadd.f32 %v645, %v735
        %v760 = vadd.f32 %v646, %v738
        %v761 = vadd.f32 %v647, %v743
        %v762 = vadd.f32 %v648, %v746
        %v763 = vadd.f32 %v649, %v751
        %v764 = vadd.f32 %v650, %v754
        %s765 = scalar_lea.vmem %s262, 216
        %v766 = vld [vmem:[%s765] sm:$0xf]
        %v767 = vld [vmem:[%s765 + $0x8] sm:$0xf]
        %v768 = vld [vmem:[%s765 + $0x10] sm:$0xf]
        %v769 = vld [vmem:[%s765 + $0x18] sm:$0xf]
        %v770 = vld [vmem:[%s765 + $0x20] sm:$0xf]
        %v771 = vld [vmem:[%s765 + $0x28] sm:$0xf]
        %v772 = vld [vmem:[%s765 + $0x30] sm:$0xf]
        %v773 = vld [vmem:[%s765 + $0x38] sm:$0xf]
        %v774 = vunpack.c.l.bf16 %v766
        %v775 = vunpack.c.l.bf16 %v767
        %v776 = vunpack.c.l.bf16 %v768
        %v777 = vunpack.c.l.bf16 %v769
        %v778 = vunpack.c.l.bf16 %v770
        %v779 = vunpack.c.l.bf16 %v771
        %v780 = vunpack.c.l.bf16 %v772
        %v781 = vunpack.c.l.bf16 %v773
        %v782 = vpack.c.bf16 %v775, %v774
        %v783 = vpack.c.bf16 %v777, %v776
        %v784 = vpack.c.bf16 %v779, %v778
        %v785 = vpack.c.bf16 %v781, %v780
        %v786 = vld [vmem:[%s1 + $0x8] sm:$0x3]
        %v788 = vsel %vm315, %v782, 0
        %v791 = vsel %vm315, %v783, 0
        %v794 = vsel %vm315, %v784, 0
        %v797 = vsel %vm315, %v785, 0
        %v800 = vsel %vm328, %v786, 0
        %802 = vmatprep.subr.bf16.mxu0 0
        %803 = vmatpush1.bf16.msra.mxu0 %v800
        %804 = vmatprep.subr.bf16.mxu0 0
        %805 = vmatpush1.bf16.msra.mxu0 0
        %806 = vmatprep.subr.bf16.mxu0 0
        %807 = vmatpush1.bf16.msra.mxu0 0
        %808 = vmatprep.subr.bf16.mxu0 0
        %809 = vmatpush1.bf16.msra.mxu0 0
        %810 = vmatprep.subr.bf16.mxu0 0
        %811 = vmatpush1.bf16.msra.mxu0 0
        %812 = vmatprep.subr.bf16.mxu0 0
        %813 = vmatpush1.bf16.msra.mxu0 0
        %814 = vmatprep.subr.bf16.mxu0 0
        %815 = vmatpush1.bf16.msra.mxu0 0
        %816 = vmatprep.subr.bf16.mxu0 0
        %817 = vmatpush1.bf16.msra.mxu0 0
        %818 = vmatprep.subr.bf16.mxu0 0
        %819 = vmatpush1.bf16.msra.mxu0 0
        %820 = vmatprep.subr.bf16.mxu0 0
        %821 = vmatpush1.bf16.msra.mxu0 0
        %822 = vmatprep.subr.bf16.mxu0 0
        %823 = vmatpush1.bf16.msra.mxu0 0
        %824 = vmatprep.subr.bf16.mxu0 0
        %825 = vmatpush1.bf16.msra.mxu0 0
        %826 = vmatprep.subr.bf16.mxu0 0
        %827 = vmatpush1.bf16.msra.mxu0 0
        %828 = vmatprep.subr.bf16.mxu0 0
        %829 = vmatpush1.bf16.msra.mxu0 0
        %830 = vmatprep.subr.bf16.mxu0 0
        %831 = vmatpush1.bf16.msra.mxu0 0
        %832 = vmatprep.subr.bf16.mxu0 0
        %833 = vmatpush1.bf16.msra.mxu0 0
        %834 = vmatprep.mubr.bf16.mxu0 0
        %835 = vmatmul.mubr.bf16.gmra.mrb[0].mxu0 %v788
        %v836 = vpop.f32.mrb[0].mxu0
        %v837 = vadd.f32 0.0, %v836
        %v838 = vpop.f32.mrb[0].mxu0
        %v839 = vpop.f32.mrb[0].mxu0
        %v840 = vadd.f32 0.0, %v839
        %v841 = vpop.f32.mrb[0].mxu0
        %842 = vmatprep.mubr.bf16.mxu0 0
        %843 = vmatmul.mubr.bf16.gmra.mrb[0].mxu0 %v791
        %v844 = vpop.f32.mrb[0].mxu0
        %v845 = vadd.f32 0.0, %v844
        %v846 = vpop.f32.mrb[0].mxu0
        %v847 = vpop.f32.mrb[0].mxu0
        %v848 = vadd.f32 0.0, %v847
        %v849 = vpop.f32.mrb[0].mxu0
        %850 = vmatprep.mubr.bf16.mxu0 0
        %851 = vmatmul.mubr.bf16.gmra.mrb[0].mxu0 %v794
        %v852 = vpop.f32.mrb[0].mxu0
        %v853 = vadd.f32 0.0, %v852
        %v854 = vpop.f32.mrb[0].mxu0
        %v855 = vpop.f32.mrb[0].mxu0
        %v856 = vadd.f32 0.0, %v855
        %v857 = vpop.f32.mrb[0].mxu0
        %858 = vmatprep.mubr.bf16.mxu0 0
        %859 = vmatmul.mubr.bf16.gmra.mrb[0].mxu0 %v797
        %v860 = vpop.f32.mrb[0].mxu0
        %v861 = vadd.f32 0.0, %v860
        %v862 = vpop.f32.mrb[0].mxu0
        %v863 = vpop.f32.mrb[0].mxu0
        %v864 = vadd.f32 0.0, %v863
        %v865 = vpop.f32.mrb[0].mxu0
        %866 = vdwg.mxu0
        %v867 = vadd.f32 %v757, %v837
        %v868 = vadd.f32 %v758, %v840
        %v869 = vadd.f32 %v759, %v845
        %v870 = vadd.f32 %v760, %v848
        %v871 = vadd.f32 %v761, %v853
        %v872 = vadd.f32 %v762, %v856
        %v873 = vadd.f32 %v763, %v861
        %v874 = vadd.f32 %v764, %v864
        %v875 = vld [vmem:[%s651] sm:$0xf]
        %v876 = vld [vmem:[%s651 + $0x4] sm:$0x1]
        %v877 = vld [vmem:[%s651 + $0x8] sm:$0xf]
        %v878 = vld [vmem:[%s651 + $0xc] sm:$0x1]
        %v879 = vld [vmem:[%s651 + $0x10] sm:$0xf]
        %v880 = vld [vmem:[%s651 + $0x14] sm:$0x1]
        %v881 = vld [vmem:[%s651 + $0x18] sm:$0xf]
        %v882 = vld [vmem:[%s651 + $0x1c] sm:$0x1]
        %v883 = vld [vmem:[%s651 + $0x20] sm:$0xf]
        %v884 = vld [vmem:[%s651 + $0x24] sm:$0x1]
        %v885 = vld [vmem:[%s651 + $0x28] sm:$0xf]
        %v886 = vld [vmem:[%s651 + $0x2c] sm:$0x1]
        %v887 = vld [vmem:[%s651 + $0x30] sm:$0xf]
        %v888 = vld [vmem:[%s651 + $0x34] sm:$0x1]
        %v889 = vld [vmem:[%s651 + $0x38] sm:$0xf]
        %v890 = vld [vmem:[%s651 + $0x3c] sm:$0x1]
        %v891 = vunpack.c.l.bf16 %v875
        %v892 = vunpack.c.l.bf16 %v876
        %v893 = vunpack.c.l.bf16 %v877
        %v894 = vunpack.c.l.bf16 %v878
        %v895 = vunpack.c.l.bf16 %v879
        %v896 = vunpack.c.l.bf16 %v880
        %v897 = vunpack.c.l.bf16 %v881
        %v898 = vunpack.c.l.bf16 %v882
        %v899 = vunpack.c.l.bf16 %v883
        %v900 = vunpack.c.l.bf16 %v884
        %v901 = vunpack.c.l.bf16 %v885
        %v902 = vunpack.c.l.bf16 %v886
        %v903 = vunpack.c.l.bf16 %v887
        %v904 = vunpack.c.l.bf16 %v888
        %v905 = vunpack.c.l.bf16 %v889
        %v906 = vunpack.c.l.bf16 %v890
        %v923 = vrot.slane %v891, 1
        %v924 = vrot.slane %v892, 1
        %v925 = vsel %vm525, %v923, %v924
        %v926 = vrot.slane %v893, 1
        %v927 = vrot.slane %v894, 1
        %v928 = vsel %vm525, %v926, %v927
        %v929 = vrot.slane %v895, 1
        %v930 = vrot.slane %v896, 1
        %v931 = vsel %vm525, %v929, %v930
        %v932 = vrot.slane %v897, 1
        %v933 = vrot.slane %v898, 1
        %v934 = vsel %vm525, %v932, %v933
        %v935 = vrot.slane %v899, 1
        %v936 = vrot.slane %v900, 1
        %v937 = vsel %vm525, %v935, %v936
        %v938 = vrot.slane %v901, 1
        %v939 = vrot.slane %v902, 1
        %v940 = vsel %vm525, %v938, %v939
        %v941 = vrot.slane %v903, 1
        %v942 = vrot.slane %v904, 1
        %v943 = vsel %vm525, %v941, %v942
        %v944 = vrot.slane %v905, 1
        %v945 = vrot.slane %v906, 1
        %v946 = vsel %vm525, %v944, %v945
        %v955 = vpack.c.bf16 %v928, %v925
        %v956 = vpack.c.bf16 %v934, %v931
        %v957 = vpack.c.bf16 %v940, %v937
        %v958 = vpack.c.bf16 %v946, %v943
        %v959 = vld [vmem:[%s1 + $0x8] sm:$0xc]
        %v961 = vunpack.c.l.b16 %v959
        %v962 = vpack.c.b16 %v961, %v961
        %v963 = vrot.slane %v962, 2
        %v965 = vsel %vm315, %v955, 0
        %v968 = vsel %vm315, %v956, 0
        %v971 = vsel %vm315, %v957, 0
        %v974 = vsel %vm315, %v958, 0
        %v977 = vsel %vm328, %v963, 0
        %979 = vmatprep.subr.bf16.mxu0 0
        %980 = vmatpush1.bf16.msra.mxu0 %v977
        %981 = vmatprep.subr.bf16.mxu0 0
        %982 = vmatpush1.bf16.msra.mxu0 0
        %983 = vmatprep.subr.bf16.mxu0 0
        %984 = vmatpush1.bf16.msra.mxu0 0
        %985 = vmatprep.subr.bf16.mxu0 0
        %986 = vmatpush1.bf16.msra.mxu0 0
        %987 = vmatprep.subr.bf16.mxu0 0
        %988 = vmatpush1.bf16.msra.mxu0 0
        %989 = vmatprep.subr.bf16.mxu0 0
        %990 = vmatpush1.bf16.msra.mxu0 0
        %991 = vmatprep.subr.bf16.mxu0 0
        %992 = vmatpush1.bf16.msra.mxu0 0
        %993 = vmatprep.subr.bf16.mxu0 0
        %994 = vmatpush1.bf16.msra.mxu0 0
        %995 = vmatprep.subr.bf16.mxu0 0
        %996 = vmatpush1.bf16.msra.mxu0 0
        %997 = vmatprep.subr.bf16.mxu0 0
        %998 = vmatpush1.bf16.msra.mxu0 0
        %999 = vmatprep.subr.bf16.mxu0 0
        %1000 = vmatpush1.bf16.msra.mxu0 0
        %1001 = vmatprep.subr.bf16.mxu0 0
        %1002 = vmatpush1.bf16.msra.mxu0 0
        %1003 = vmatprep.subr.bf16.mxu0 0
        %1004 = vmatpush1.bf16.msra.mxu0 0
        %1005 = vmatprep.subr.bf16.mxu0 0
        %1006 = vmatpush1.bf16.msra.mxu0 0
        %1007 = vmatprep.subr.bf16.mxu0 0
        %1008 = vmatpush1.bf16.msra.mxu0 0
        %1009 = vmatprep.subr.bf16.mxu0 0
        %1010 = vmatpush1.bf16.msra.mxu0 0
        %1011 = vmatprep.mubr.bf16.mxu0 0
        %1012 = vmatmul.mubr.bf16.gmra.mrb[0].mxu0 %v965
        %v1013 = vpop.f32.mrb[0].mxu0
        %v1014 = vadd.f32 0.0, %v1013
        %v1015 = vpop.f32.mrb[0].mxu0
        %v1016 = vpop.f32.mrb[0].mxu0
        %v1017 = vadd.f32 0.0, %v1016
        %v1018 = vpop.f32.mrb[0].mxu0
        %1019 = vmatprep.mubr.bf16.mxu0 0
        %1020 = vmatmul.mubr.bf16.gmra.mrb[0].mxu0 %v968
        %v1021 = vpop.f32.mrb[0].mxu0
        %v1022 = vadd.f32 0.0, %v1021
        %v1023 = vpop.f32.mrb[0].mxu0
        %v1024 = vpop.f32.mrb[0].mxu0
        %v1025 = vadd.f32 0.0, %v1024
        %v1026 = vpop.f32.mrb[0].mxu0
        %1027 = vmatprep.mubr.bf16.mxu0 0
        %1028 = vmatmul.mubr.bf16.gmra.mrb[0].mxu0 %v971
        %v1029 = vpop.f32.mrb[0].mxu0
        %v1030 = vadd.f32 0.0, %v1029
        %v1031 = vpop.f32.mrb[0].mxu0
        %v1032 = vpop.f32.mrb[0].mxu0
        %v1033 = vadd.f32 0.0, %v1032
        %v1034 = vpop.f32.mrb[0].mxu0
        %1035 = vmatprep.mubr.bf16.mxu0 0
        %1036 = vmatmul.mubr.bf16.gmra.mrb[0].mxu0 %v974
        %v1037 = vpop.f32.mrb[0].mxu0
        %v1038 = vadd.f32 0.0, %v1037
        %v1039 = vpop.f32.mrb[0].mxu0
        %v1040 = vpop.f32.mrb[0].mxu0
        %v1041 = vadd.f32 0.0, %v1040
        %v1042 = vpop.f32.mrb[0].mxu0
        %1043 = vdwg.mxu0
        %v1044 = vadd.f32 %v867, %v1014
        %v1045 = vadd.f32 %v868, %v1017
        %v1046 = vadd.f32 %v869, %v1022
        %v1047 = vadd.f32 %v870, %v1025
        %v1048 = vadd.f32 %v871, %v1030
        %v1049 = vadd.f32 %v872, %v1033
        %v1050 = vadd.f32 %v873, %v1038
        %v1051 = vadd.f32 %v874, %v1041
        %s1052 = scalar_lea.vmem %s262, 8
        %v1053 = vld [vmem:[%s1052] sm:$0xf]
        %v1054 = vld [vmem:[%s1052 + $0x8] sm:$0xf]
        %v1055 = vld [vmem:[%s1052 + $0x10] sm:$0xf]
        %v1056 = vld [vmem:[%s1052 + $0x18] sm:$0xf]
        %v1057 = vld [vmem:[%s1052 + $0x20] sm:$0xf]
        %v1058 = vld [vmem:[%s1052 + $0x28] sm:$0xf]
        %v1059 = vld [vmem:[%s1052 + $0x30] sm:$0xf]
        %v1060 = vld [vmem:[%s1052 + $0x38] sm:$0xf]
        %v1061 = vunpack.c.l.bf16 %v1053
        %v1062 = vunpack.c.l.bf16 %v1054
        %v1063 = vunpack.c.l.bf16 %v1055
        %v1064 = vunpack.c.l.bf16 %v1056
        %v1065 = vunpack.c.l.bf16 %v1057
        %v1066 = vunpack.c.l.bf16 %v1058
        %v1067 = vunpack.c.l.bf16 %v1059
        %v1068 = vunpack.c.l.bf16 %v1060
        %v1069 = vpack.c.bf16 %v1062, %v1061
        %v1070 = vpack.c.bf16 %v1064, %v1063
        %v1071 = vpack.c.bf16 %v1066, %v1065
        %v1072 = vpack.c.bf16 %v1068, %v1067
        %v1073 = vld [vmem:[%s1 + $0xc] sm:$0x3]
        %v1075 = vsel %vm315, %v1069, 0
        %v1078 = vsel %vm315, %v1070, 0
        %v1081 = vsel %vm315, %v1071, 0
        %v1084 = vsel %vm315, %v1072, 0
        %v1087 = vsel %vm328, %v1073, 0
        %1089 = vmatprep.subr.bf16.mxu0 0
        %1090 = vmatpush1.bf16.msra.mxu0 %v1087
        %1091 = vmatprep.subr.bf16.mxu0 0
        %1092 = vmatpush1.bf16.msra.mxu0 0
        %1093 = vmatprep.subr.bf16.mxu0 0
        %1094 = vmatpush1.bf16.msra.mxu0 0
        %1095 = vmatprep.subr.bf16.mxu0 0
        %1096 = vmatpush1.bf16.msra.mxu0 0
        %1097 = vmatprep.subr.bf16.mxu0 0
        %1098 = vmatpush1.bf16.msra.mxu0 0
        %1099 = vmatprep.subr.bf16.mxu0 0
        %1100 = vmatpush1.bf16.msra.mxu0 0
        %1101 = vmatprep.subr.bf16.mxu0 0
        %1102 = vmatpush1.bf16.msra.mxu0 0
        %1103 = vmatprep.subr.bf16.mxu0 0
        %1104 = vmatpush1.bf16.msra.mxu0 0
        %1105 = vmatprep.subr.bf16.mxu0 0
        %1106 = vmatpush1.bf16.msra.mxu0 0
        %1107 = vmatprep.subr.bf16.mxu0 0
        %1108 = vmatpush1.bf16.msra.mxu0 0
        %1109 = vmatprep.subr.bf16.mxu0 0
        %1110 = vmatpush1.bf16.msra.mxu0 0
        %1111 = vmatprep.subr.bf16.mxu0 0
        %1112 = vmatpush1.bf16.msra.mxu0 0
        %1113 = vmatprep.subr.bf16.mxu0 0
        %1114 = vmatpush1.bf16.msra.mxu0 0
        %1115 = vmatprep.subr.bf16.mxu0 0
        %1116 = vmatpush1.bf16.msra.mxu0 0
        %1117 = vmatprep.subr.bf16.mxu0 0
        %1118 = vmatpush1.bf16.msra.mxu0 0
        %1119 = vmatprep.subr.bf16.mxu0 0
        %1120 = vmatpush1.bf16.msra.mxu0 0
        %1121 = vmatprep.mubr.bf16.mxu0 0
        %1122 = vmatmul.mubr.bf16.gmra.mrb[0].mxu0 %v1075
        %v1123 = vpop.f32.mrb[0].mxu0
        %v1124 = vadd.f32 0.0, %v1123
        %v1125 = vpop.f32.mrb[0].mxu0
        %v1126 = vpop.f32.mrb[0].mxu0
        %v1127 = vadd.f32 0.0, %v1126
        %v1128 = vpop.f32.mrb[0].mxu0
        %1129 = vmatprep.mubr.bf16.mxu0 0
        %1130 = vmatmul.mubr.bf16.gmra.mrb[0].mxu0 %v1078
        %v1131 = vpop.f32.mrb[0].mxu0
        %v1132 = vadd.f32 0.0, %v1131
        %v1133 = vpop.f32.mrb[0].mxu0
        %v1134 = vpop.f32.mrb[0].mxu0
        %v1135 = vadd.f32 0.0, %v1134
        %v1136 = vpop.f32.mrb[0].mxu0
        %1137 = vmatprep.mubr.bf16.mxu0 0
        %1138 = vmatmul.mubr.bf16.gmra.mrb[0].mxu0 %v1081
        %v1139 = vpop.f32.mrb[0].mxu0
        %v1140 = vadd.f32 0.0, %v1139
        %v1141 = vpop.f32.mrb[0].mxu0
        %v1142 = vpop.f32.mrb[0].mxu0
        %v1143 = vadd.f32 0.0, %v1142
        %v1144 = vpop.f32.mrb[0].mxu0
        %1145 = vmatprep.mubr.bf16.mxu0 0
        %1146 = vmatmul.mubr.bf16.gmra.mrb[0].mxu0 %v1084
        %v1147 = vpop.f32.mrb[0].mxu0
        %v1148 = vadd.f32 0.0, %v1147
        %v1149 = vpop.f32.mrb[0].mxu0
        %v1150 = vpop.f32.mrb[0].mxu0
        %v1151 = vadd.f32 0.0, %v1150
        %v1152 = vpop.f32.mrb[0].mxu0
        %1153 = vdwg.mxu0
        %v1154 = vadd.f32 %v1044, %v1124
        %v1155 = vadd.f32 %v1045, %v1127
        %v1156 = vadd.f32 %v1046, %v1132
        %v1157 = vadd.f32 %v1047, %v1135
        %v1158 = vadd.f32 %v1048, %v1140
        %v1159 = vadd.f32 %v1049, %v1143
        %v1160 = vadd.f32 %v1050, %v1148
        %v1161 = vadd.f32 %v1051, %v1151
        %s1162 = scalar_lea.vmem %s262, 80
        %v1163 = vld [vmem:[%s1162] sm:$0xf]
        %v1164 = vld [vmem:[%s1162 + $0x8] sm:$0xf]
        %v1165 = vld [vmem:[%s1162 + $0x10] sm:$0xf]
        %v1166 = vld [vmem:[%s1162 + $0x18] sm:$0xf]
        %v1167 = vld [vmem:[%s1162 + $0x20] sm:$0xf]
        %v1168 = vld [vmem:[%s1162 + $0x28] sm:$0xf]
        %v1169 = vld [vmem:[%s1162 + $0x30] sm:$0xf]
        %v1170 = vld [vmem:[%s1162 + $0x38] sm:$0xf]
        %v1171 = vunpack.c.l.bf16 %v1163
        %v1172 = vunpack.c.l.bf16 %v1164
        %v1173 = vunpack.c.l.bf16 %v1165
        %v1174 = vunpack.c.l.bf16 %v1166
        %v1175 = vunpack.c.l.bf16 %v1167
        %v1176 = vunpack.c.l.bf16 %v1168
        %v1177 = vunpack.c.l.bf16 %v1169
        %v1178 = vunpack.c.l.bf16 %v1170
        %v1179 = vpack.c.bf16 %v1172, %v1171
        %v1180 = vpack.c.bf16 %v1174, %v1173
        %v1181 = vpack.c.bf16 %v1176, %v1175
        %v1182 = vpack.c.bf16 %v1178, %v1177
        %v1183 = vld [vmem:[%s1 + $0xc] sm:$0xc]
        %v1185 = vunpack.c.l.b16 %v1183
        %v1186 = vpack.c.b16 %v1185, %v1185
        %v1187 = vrot.slane %v1186, 2
        %v1189 = vsel %vm315, %v1179, 0
        %v1192 = vsel %vm315, %v1180, 0
        %v1195 = vsel %vm315, %v1181, 0
        %v1198 = vsel %vm315, %v1182, 0
        %v1201 = vsel %vm328, %v1187, 0
        %1203 = vmatprep.subr.bf16.mxu0 0
        %1204 = vmatpush1.bf16.msra.mxu0 %v1201
        %1205 = vmatprep.subr.bf16.mxu0 0
        %1206 = vmatpush1.bf16.msra.mxu0 0
        %1207 = vmatprep.subr.bf16.mxu0 0
        %1208 = vmatpush1.bf16.msra.mxu0 0
        %1209 = vmatprep.subr.bf16.mxu0 0
        %1210 = vmatpush1.bf16.msra.mxu0 0
        %1211 = vmatprep.subr.bf16.mxu0 0
        %1212 = vmatpush1.bf16.msra.mxu0 0
        %1213 = vmatprep.subr.bf16.mxu0 0
        %1214 = vmatpush1.bf16.msra.mxu0 0
        %1215 = vmatprep.subr.bf16.mxu0 0
        %1216 = vmatpush1.bf16.msra.mxu0 0
        %1217 = vmatprep.subr.bf16.mxu0 0
        %1218 = vmatpush1.bf16.msra.mxu0 0
        %1219 = vmatprep.subr.bf16.mxu0 0
        %1220 = vmatpush1.bf16.msra.mxu0 0
        %1221 = vmatprep.subr.bf16.mxu0 0
        %1222 = vmatpush1.bf16.msra.mxu0 0
        %1223 = vmatprep.subr.bf16.mxu0 0
        %1224 = vmatpush1.bf16.msra.mxu0 0
        %1225 = vmatprep.subr.bf16.mxu0 0
        %1226 = vmatpush1.bf16.msra.mxu0 0
        %1227 = vmatprep.subr.bf16.mxu0 0
        %1228 = vmatpush1.bf16.msra.mxu0 0
        %1229 = vmatprep.subr.bf16.mxu0 0
        %1230 = vmatpush1.bf16.msra.mxu0 0
        %1231 = vmatprep.subr.bf16.mxu0 0
        %1232 = vmatpush1.bf16.msra.mxu0 0
        %1233 = vmatprep.subr.bf16.mxu0 0
        %1234 = vmatpush1.bf16.msra.mxu0 0
        %1235 = vmatprep.mubr.bf16.mxu0 0
        %1236 = vmatmul.mubr.bf16.gmra.mrb[0].mxu0 %v1189
        %v1237 = vpop.f32.mrb[0].mxu0
        %v1238 = vadd.f32 0.0, %v1237
        %v1239 = vpop.f32.mrb[0].mxu0
        %v1240 = vpop.f32.mrb[0].mxu0
        %v1241 = vadd.f32 0.0, %v1240
        %v1242 = vpop.f32.mrb[0].mxu0
        %1243 = vmatprep.mubr.bf16.mxu0 0
        %1244 = vmatmul.mubr.bf16.gmra.mrb[0].mxu0 %v1192
        %v1245 = vpop.f32.mrb[0].mxu0
        %v1246 = vadd.f32 0.0, %v1245
        %v1247 = vpop.f32.mrb[0].mxu0
        %v1248 = vpop.f32.mrb[0].mxu0
        %v1249 = vadd.f32 0.0, %v1248
        %v1250 = vpop.f32.mrb[0].mxu0
        %1251 = vmatprep.mubr.bf16.mxu0 0
        %1252 = vmatmul.mubr.bf16.gmra.mrb[0].mxu0 %v1195
        %v1253 = vpop.f32.mrb[0].mxu0
        %v1254 = vadd.f32 0.0, %v1253
        %v1255 = vpop.f32.mrb[0].mxu0
        %v1256 = vpop.f32.mrb[0].mxu0
        %v1257 = vadd.f32 0.0, %v1256
        %v1258 = vpop.f32.mrb[0].mxu0
        %1259 = vmatprep.mubr.bf16.mxu0 0
        %1260 = vmatmul.mubr.bf16.gmra.mrb[0].mxu0 %v1198
        %v1261 = vpop.f32.mrb[0].mxu0
        %v1262 = vadd.f32 0.0, %v1261
        %v1263 = vpop.f32.mrb[0].mxu0
        %v1264 = vpop.f32.mrb[0].mxu0
        %v1265 = vadd.f32 0.0, %v1264
        %v1266 = vpop.f32.mrb[0].mxu0
        %1267 = vdwg.mxu0
        %v1268 = vadd.f32 %v1154, %v1238
        %v1269 = vadd.f32 %v1155, %v1241
        %v1270 = vadd.f32 %v1156, %v1246
        %v1271 = vadd.f32 %v1157, %v1249
        %v1272 = vadd.f32 %v1158, %v1254
        %v1273 = vadd.f32 %v1159, %v1257
        %v1274 = vadd.f32 %v1160, %v1262
        %v1275 = vadd.f32 %v1161, %v1265
        %v1276 = vld [vmem:[%s1052] sm:$0xf]
        %v1277 = vld [vmem:[%s1052 + $0x4] sm:$0x1]
        %v1278 = vld [vmem:[%s1052 + $0x8] sm:$0xf]
        %v1279 = vld [vmem:[%s1052 + $0xc] sm:$0x1]
        %v1280 = vld [vmem:[%s1052 + $0x10] sm:$0xf]
        %v1281 = vld [vmem:[%s1052 + $0x14] sm:$0x1]
        %v1282 = vld [vmem:[%s1052 + $0x18] sm:$0xf]
        %v1283 = vld [vmem:[%s1052 + $0x1c] sm:$0x1]
        %v1284 = vld [vmem:[%s1052 + $0x20] sm:$0xf]
        %v1285 = vld [vmem:[%s1052 + $0x24] sm:$0x1]
        %v1286 = vld [vmem:[%s1052 + $0x28] sm:$0xf]
        %v1287 = vld [vmem:[%s1052 + $0x2c] sm:$0x1]
        %v1288 = vld [vmem:[%s1052 + $0x30] sm:$0xf]
        %v1289 = vld [vmem:[%s1052 + $0x34] sm:$0x1]
        %v1290 = vld [vmem:[%s1052 + $0x38] sm:$0xf]
        %v1291 = vld [vmem:[%s1052 + $0x3c] sm:$0x1]
        %v1292 = vunpack.c.l.bf16 %v1276
        %v1293 = vunpack.c.l.bf16 %v1277
        %v1294 = vunpack.c.l.bf16 %v1278
        %v1295 = vunpack.c.l.bf16 %v1279
        %v1296 = vunpack.c.l.bf16 %v1280
        %v1297 = vunpack.c.l.bf16 %v1281
        %v1298 = vunpack.c.l.bf16 %v1282
        %v1299 = vunpack.c.l.bf16 %v1283
        %v1300 = vunpack.c.l.bf16 %v1284
        %v1301 = vunpack.c.l.bf16 %v1285
        %v1302 = vunpack.c.l.bf16 %v1286
        %v1303 = vunpack.c.l.bf16 %v1287
        %v1304 = vunpack.c.l.bf16 %v1288
        %v1305 = vunpack.c.l.bf16 %v1289
        %v1306 = vunpack.c.l.bf16 %v1290
        %v1307 = vunpack.c.l.bf16 %v1291
        %v1324 = vrot.slane %v1292, 1
        %v1325 = vrot.slane %v1293, 1
        %v1326 = vsel %vm525, %v1324, %v1325
        %v1327 = vrot.slane %v1294, 1
        %v1328 = vrot.slane %v1295, 1
        %v1329 = vsel %vm525, %v1327, %v1328
        %v1330 = vrot.slane %v1296, 1
        %v1331 = vrot.slane %v1297, 1
        %v1332 = vsel %vm525, %v1330, %v1331
        %v1333 = vrot.slane %v1298, 1
        %v1334 = vrot.slane %v1299, 1
        %v1335 = vsel %vm525, %v1333, %v1334
        %v1336 = vrot.slane %v1300, 1
        %v1337 = vrot.slane %v1301, 1
        %v1338 = vsel %vm525, %v1336, %v1337
        %v1339 = vrot.slane %v1302, 1
        %v1340 = vrot.slane %v1303, 1
        %v1341 = vsel %vm525, %v1339, %v1340
        %v1342 = vrot.slane %v1304, 1
        %v1343 = vrot.slane %v1305, 1
        %v1344 = vsel %vm525, %v1342, %v1343
        %v1345 = vrot.slane %v1306, 1
        %v1346 = vrot.slane %v1307, 1
        %v1347 = vsel %vm525, %v1345, %v1346
        %v1356 = vpack.c.bf16 %v1329, %v1326
        %v1357 = vpack.c.bf16 %v1335, %v1332
        %v1358 = vpack.c.bf16 %v1341, %v1338
        %v1359 = vpack.c.bf16 %v1347, %v1344
        %v1360 = vld [vmem:[%s1 + $0x10] sm:$0x3]
        %v1362 = vsel %vm315, %v1356, 0
        %v1365 = vsel %vm315, %v1357, 0
        %v1368 = vsel %vm315, %v1358, 0
        %v1371 = vsel %vm315, %v1359, 0
        %v1374 = vsel %vm328, %v1360, 0
        %1376 = vmatprep.subr.bf16.mxu0 0
        %1377 = vmatpush1.bf16.msra.mxu0 %v1374
        %1378 = vmatprep.subr.bf16.mxu0 0
        %1379 = vmatpush1.bf16.msra.mxu0 0
        %1380 = vmatprep.subr.bf16.mxu0 0
        %1381 = vmatpush1.bf16.msra.mxu0 0
        %1382 = vmatprep.subr.bf16.mxu0 0
        %1383 = vmatpush1.bf16.msra.mxu0 0
        %1384 = vmatprep.subr.bf16.mxu0 0
        %1385 = vmatpush1.bf16.msra.mxu0 0
        %1386 = vmatprep.subr.bf16.mxu0 0
        %1387 = vmatpush1.bf16.msra.mxu0 0
        %1388 = vmatprep.subr.bf16.mxu0 0
        %1389 = vmatpush1.bf16.msra.mxu0 0
        %1390 = vmatprep.subr.bf16.mxu0 0
        %1391 = vmatpush1.bf16.msra.mxu0 0
        %1392 = vmatprep.subr.bf16.mxu0 0
        %1393 = vmatpush1.bf16.msra.mxu0 0
        %1394 = vmatprep.subr.bf16.mxu0 0
        %1395 = vmatpush1.bf16.msra.mxu0 0
        %1396 = vmatprep.subr.bf16.mxu0 0
        %1397 = vmatpush1.bf16.msra.mxu0 0
        %1398 = vmatprep.subr.bf16.mxu0 0
        %1399 = vmatpush1.bf16.msra.mxu0 0
        %1400 = vmatprep.subr.bf16.mxu0 0
        %1401 = vmatpush1.bf16.msra.mxu0 0
        %1402 = vmatprep.subr.bf16.mxu0 0
        %1403 = vmatpush1.bf16.msra.mxu0 0
        %1404 = vmatprep.subr.bf16.mxu0 0
        %1405 = vmatpush1.bf16.msra.mxu0 0
        %1406 = vmatprep.subr.bf16.mxu0 0
        %1407 = vmatpush1.bf16.msra.mxu0 0
        %1408 = vmatprep.mubr.bf16.mxu0 0
        %1409 = vmatmul.mubr.bf16.gmra.mrb[0].mxu0 %v1362
        %v1410 = vpop.f32.mrb[0].mxu0
        %v1411 = vadd.f32 0.0, %v1410
        %v1412 = vpop.f32.mrb[0].mxu0
        %v1413 = vpop.f32.mrb[0].mxu0
        %v1414 = vadd.f32 0.0, %v1413
        %v1415 = vpop.f32.mrb[0].mxu0
        %1416 = vmatprep.mubr.bf16.mxu0 0
        %1417 = vmatmul.mubr.bf16.gmra.mrb[0].mxu0 %v1365
        %v1418 = vpop.f32.mrb[0].mxu0
        %v1419 = vadd.f32 0.0, %v1418
        %v1420 = vpop.f32.mrb[0].mxu0
        %v1421 = vpop.f32.mrb[0].mxu0
        %v1422 = vadd.f32 0.0, %v1421
        %v1423 = vpop.f32.mrb[0].mxu0
        %1424 = vmatprep.mubr.bf16.mxu0 0
        %1425 = vmatmul.mubr.bf16.gmra.mrb[0].mxu0 %v1368
        %v1426 = vpop.f32.mrb[0].mxu0
        %v1427 = vadd.f32 0.0, %v1426
        %v1428 = vpop.f32.mrb[0].mxu0
        %v1429 = vpop.f32.mrb[0].mxu0
        %v1430 = vadd.f32 0.0, %v1429
        %v1431 = vpop.f32.mrb[0].mxu0
        %1432 = vmatprep.mubr.bf16.mxu0 0
        %1433 = vmatmul.mubr.bf16.gmra.mrb[0].mxu0 %v1371
        %v1434 = vpop.f32.mrb[0].mxu0
        %v1435 = vadd.f32 0.0, %v1434
        %v1436 = vpop.f32.mrb[0].mxu0
        %v1437 = vpop.f32.mrb[0].mxu0
        %v1438 = vadd.f32 0.0, %v1437
        %v1439 = vpop.f32.mrb[0].mxu0
        %1440 = vdwg.mxu0
        %v1441 = vadd.f32 %v1268, %v1411
        %v1442 = vadd.f32 %v1269, %v1414
        %v1443 = vadd.f32 %v1270, %v1419
        %v1444 = vadd.f32 %v1271, %v1422
        %v1445 = vadd.f32 %v1272, %v1427
        %v1446 = vadd.f32 %v1273, %v1430
        %v1447 = vadd.f32 %v1274, %v1435
        %v1448 = vadd.f32 %v1275, %v1438
        %v1449 = vld [vmem:[%s2] sm:$0x1]
        %v1451 = vlaneseq
        %v1452 = vshrl.u32 %v1451, 7
        %v1453 = vsub.s32 0, %v1452
        %v1454 = vrot.slane %v1449, %v1453
        %v1456 = vadd.f32 %v1441, %v1454
        %v1457 = vadd.f32 %v1442, %v1454
        %v1458 = vadd.f32 %v1443, %v1454
        %v1459 = vadd.f32 %v1444, %v1454
        %v1460 = vadd.f32 %v1445, %v1454
        %v1461 = vadd.f32 %v1446, %v1454
        %v1462 = vadd.f32 %v1447, %v1454
        %v1463 = vadd.f32 %v1448, %v1454
        %v1464 = vmax.f32 %v1456, 0.0
        %v1465 = vmax.f32 %v1457, 0.0
        %v1466 = vmax.f32 %v1458, 0.0
        %v1467 = vmax.f32 %v1459, 0.0
        %v1468 = vmax.f32 %v1460, 0.0
        %v1469 = vmax.f32 %v1461, 0.0
        %v1470 = vmax.f32 %v1462, 0.0
        %v1471 = vmax.f32 %v1463, 0.0
        %vm1472 = vcmask 64512
        %1473 = vst.msk [vmem:[#allocation2] sm:$0xff] %vm1472, 0.0
        %vm1474 = vcmask 58368
        %1475 = vst.msk [vmem:[#allocation2 + $0x8] sm:$0x3] %vm1474, 0.0
        %1476 = vst.msk [vmem:[#allocation2 + $0x10] sm:$0xff] %vm1472, 0.0
        %1477 = vst.msk [vmem:[#allocation2 + $0x18] sm:$0x3] %vm1474, 0.0
        %1478 = vst.msk [vmem:[#allocation2 + $0x20] sm:$0xff] %vm1472, 0.0
        %1479 = vst.msk [vmem:[#allocation2 + $0x28] sm:$0x3] %vm1474, 0.0
        %1480 = vst.msk [vmem:[#allocation2 + $0x30] sm:$0xff] %vm1472, 0.0
        %1481 = vst.msk [vmem:[#allocation2 + $0x38] sm:$0x3] %vm1474, 0.0
        %1482 = vst.msk [vmem:[#allocation2 + $0x40] sm:$0xff] %vm1472, 0.0
        %1483 = vst.msk [vmem:[#allocation2 + $0x48] sm:$0x3] %vm1474, 0.0
        %1484 = vst.msk [vmem:[#allocation2 + $0x50] sm:$0xff] %vm1472, 0.0
        %1485 = vst.msk [vmem:[#allocation2 + $0x58] sm:$0x3] %vm1474, 0.0
        %1486 = vst.msk [vmem:[#allocation2 + $0x60] sm:$0xff] %vm1472, 0.0
        %1487 = vst.msk [vmem:[#allocation2 + $0x68] sm:$0x3] %vm1474, 0.0
        %1488 = vst.msk [vmem:[#allocation2 + $0x70] sm:$0xff] %vm1472, 0.0
        %1489 = vst.msk [vmem:[#allocation2 + $0x78] sm:$0x3] %vm1474, 0.0
        %1490 = vst.msk [vmem:[#allocation2 + $0x80] sm:$0xff] %vm1472, 0.0
        %1491 = vst.msk [vmem:[#allocation2 + $0x88] sm:$0x3] %vm1474, 0.0
        %1492 = vst.msk [vmem:[#allocation2 + $0x90] sm:$0xff] %vm1472, 0.0
        %1493 = vst.msk [vmem:[#allocation2 + $0x98] sm:$0x3] %vm1474, 0.0
        %s1494 = scalar_lea.vmem [#allocation2], 16
        %1495 = vst.msk [vmem:[%s1494 + $0x1] sm:$0xff] %vm1472, %v1464
        %1496 = vst.msk [vmem:[%s1494 + $0x11] sm:$0xff] %vm1472, %v1465
        %1497 = vst.msk [vmem:[%s1494 + $0x21] sm:$0xff] %vm1472, %v1466
        %1498 = vst.msk [vmem:[%s1494 + $0x31] sm:$0xff] %vm1472, %v1467
        %1499 = vst.msk [vmem:[%s1494 + $0x41] sm:$0xff] %vm1472, %v1468
        %1500 = vst.msk [vmem:[%s1494 + $0x51] sm:$0xff] %vm1472, %v1469
        %1501 = vst.msk [vmem:[%s1494 + $0x61] sm:$0xff] %vm1472, %v1470
        %1502 = vst.msk [vmem:[%s1494 + $0x71] sm:$0xff] %vm1472, %v1471
        %v1503 = vld [vmem:[#allocation2] sm:$0xff]
        %v1504 = vld [vmem:[#allocation2 + $0x10] sm:$0xff]
        %v1505 = vld [vmem:[#allocation2 + $0x20] sm:$0xff]
        %v1506 = vld [vmem:[#allocation2 + $0x30] sm:$0xff]
        %v1507 = vld [vmem:[#allocation2 + $0x40] sm:$0xff]
        %v1508 = vld [vmem:[#allocation2 + $0x50] sm:$0xff]
        %v1509 = vld [vmem:[#allocation2 + $0x60] sm:$0xff]
        %v1510 = vld [vmem:[#allocation2 + $0x70] sm:$0xff]
        %v1511 = vpack.c.bf16 %v1504, %v1503
        %v1512 = vpack.c.bf16 %v1506, %v1505
        %v1513 = vpack.c.bf16 %v1508, %v1507
        %v1514 = vpack.c.bf16 %v1510, %v1509
        %v1515 = vld [vmem:[%s3] sm:$0xf]
        %v1516 = vld [vmem:[#allocation2 + $0x1] sm:$0xff]
        %v1517 = vld [vmem:[#allocation2 + $0x11] sm:$0xff]
        %v1518 = vld [vmem:[#allocation2 + $0x21] sm:$0xff]
        %v1519 = vld [vmem:[#allocation2 + $0x31] sm:$0xff]
        %v1520 = vld [vmem:[#allocation2 + $0x41] sm:$0xff]
        %v1521 = vld [vmem:[#allocation2 + $0x51] sm:$0xff]
        %v1522 = vld [vmem:[#allocation2 + $0x61] sm:$0xff]
        %v1523 = vld [vmem:[#allocation2 + $0x71] sm:$0xff]
        %v1524 = vpack.c.bf16 %v1517, %v1516
        %v1525 = vpack.c.bf16 %v1519, %v1518
        %v1526 = vpack.c.bf16 %v1521, %v1520
        %v1527 = vpack.c.bf16 %v1523, %v1522
        %v1529 = vunpack.c.l.b16 %v1515
        %v1530 = vpack.c.b16 %v1529, %v1529
        %1531 = vrot.lane.b32.xlu0 %v1530, 120
        %v1532 = vpop.permute.xlu0 %1531
        %v1534 = vsel %vm1472, %v1532, 0
        %v1537 = vsel %vm1472, %v1524, 0
        %v1540 = vsel %vm1472, %v1525, 0
        %v1543 = vsel %vm1472, %v1526, 0
        %v1546 = vsel %vm1472, %v1527, 0
        %1548 = vmatprep.subr.bf16.mxu0 0
        %1549 = vmatpush1.bf16.xpose.msra.mxu0 %v1537
        %1550 = vmatprep.subr.bf16.mxu0 0
        %1551 = vmatpush1.bf16.xpose.msra.mxu0 %v1540
        %1552 = vmatprep.subr.bf16.mxu0 0
        %1553 = vmatpush1.bf16.xpose.msra.mxu0 %v1543
        %1554 = vmatprep.subr.bf16.mxu0 0
        %1555 = vmatpush1.bf16.xpose.msra.mxu0 %v1546
        %1556 = vmatprep.subr.bf16.mxu0 0
        %1557 = vmatpush1.bf16.xpose.msra.mxu0 0
        %1558 = vmatprep.subr.bf16.mxu0 0
        %1559 = vmatpush1.bf16.xpose.msra.mxu0 0
        %1560 = vmatprep.subr.bf16.mxu0 0
        %1561 = vmatpush1.bf16.xpose.msra.mxu0 0
        %1562 = vmatprep.subr.bf16.mxu0 0
        %1563 = vmatpush1.bf16.xpose.msra.mxu0 0
        %1564 = vmatprep.subr.bf16.mxu0 0
        %1565 = vmatpush1.bf16.xpose.msra.mxu0 0
        %1566 = vmatprep.subr.bf16.mxu0 0
        %1567 = vmatpush1.bf16.xpose.msra.mxu0 0
        %1568 = vmatprep.subr.bf16.mxu0 0
        %1569 = vmatpush1.bf16.xpose.msra.mxu0 0
        %1570 = vmatprep.subr.bf16.mxu0 0
        %1571 = vmatpush1.bf16.xpose.msra.mxu0 0
        %1572 = vmatprep.subr.bf16.mxu0 0
        %1573 = vmatpush1.bf16.xpose.msra.mxu0 0
        %1574 = vmatprep.subr.bf16.mxu0 0
        %1575 = vmatpush1.bf16.xpose.msra.mxu0 0
        %1576 = vmatprep.subr.bf16.mxu0 0
        %1577 = vmatpush1.bf16.xpose.msra.mxu0 0
        %1578 = vmatprep.subr.bf16.mxu0 0
        %1579 = vmatpush1.bf16.xpose.msra.mxu0 0
        %1580 = vmatprep.mubr.bf16.mxu0 0
        %1581 = vmatmul.mubr.bf16.gmra.mrb[0].mxu0 %v1534
        %v1582 = vpop.f32.mrb[0].mxu0
        %v1583 = vadd.f32 0.0, %v1582
        %v1584 = vpop.f32.mrb[0].mxu0
        %v1585 = vpop.f32.mrb[0].mxu0
        %v1586 = vpop.f32.mrb[0].mxu0
        %1587 = vdwg.mxu0
        %v1589 = vsel %vm1472, %v1515, 0
        %v1592 = vsel %vm1472, %v1511, 0
        %v1595 = vsel %vm1472, %v1512, 0
        %v1598 = vsel %vm1472, %v1513, 0
        %v1601 = vsel %vm1472, %v1514, 0
        %1603 = vmatprep.subr.bf16.mxu0 0
        %1604 = vmatpush1.bf16.xpose.msra.mxu0 %v1592
        %1605 = vmatprep.subr.bf16.mxu0 0
        %1606 = vmatpush1.bf16.xpose.msra.mxu0 %v1595
        %1607 = vmatprep.subr.bf16.mxu0 0
        %1608 = vmatpush1.bf16.xpose.msra.mxu0 %v1598
        %1609 = vmatprep.subr.bf16.mxu0 0
        %1610 = vmatpush1.bf16.xpose.msra.mxu0 %v1601
        %1611 = vmatprep.subr.bf16.mxu0 0
        %1612 = vmatpush1.bf16.xpose.msra.mxu0 0
        %1613 = vmatprep.subr.bf16.mxu0 0
        %1614 = vmatpush1.bf16.xpose.msra.mxu0 0
        %1615 = vmatprep.subr.bf16.mxu0 0
        %1616 = vmatpush1.bf16.xpose.msra.mxu0 0
        %1617 = vmatprep.subr.bf16.mxu0 0
        %1618 = vmatpush1.bf16.xpose.msra.mxu0 0
        %1619 = vmatprep.subr.bf16.mxu0 0
        %1620 = vmatpush1.bf16.xpose.msra.mxu0 0
        %1621 = vmatprep.subr.bf16.mxu0 0
        %1622 = vmatpush1.bf16.xpose.msra.mxu0 0
        %1623 = vmatprep.subr.bf16.mxu0 0
        %1624 = vmatpush1.bf16.xpose.msra.mxu0 0
        %1625 = vmatprep.subr.bf16.mxu0 0
        %1626 = vmatpush1.bf16.xpose.msra.mxu0 0
        %1627 = vmatprep.subr.bf16.mxu0 0
        %1628 = vmatpush1.bf16.xpose.msra.mxu0 0
        %1629 = vmatprep.subr.bf16.mxu0 0
        %1630 = vmatpush1.bf16.xpose.msra.mxu0 0
        %1631 = vmatprep.subr.bf16.mxu0 0
        %1632 = vmatpush1.bf16.xpose.msra.mxu0 0
        %1633 = vmatprep.subr.bf16.mxu0 0
        %1634 = vmatpush1.bf16.xpose.msra.mxu0 0
        %1635 = vmatprep.mubr.bf16.mxu0 0
        %1636 = vmatmul.mubr.bf16.gmra.mrb[0].mxu0 %v1589
        %v1637 = vpop.f32.mrb[0].mxu0
        %v1638 = vadd.f32 %v1583, %v1637
        %v1639 = vpop.f32.mrb[0].mxu0
        %v1640 = vpop.f32.mrb[0].mxu0
        %v1641 = vpop.f32.mrb[0].mxu0
        %1642 = vdwg.mxu0
        %v1643 = vld [vmem:[#allocation2 + $0x2] sm:$0xff]
        %v1644 = vld [vmem:[#allocation2 + $0x12] sm:$0xff]
        %v1645 = vld [vmem:[#allocation2 + $0x22] sm:$0xff]
        %v1646 = vld [vmem:[#allocation2 + $0x32] sm:$0xff]
        %v1647 = vld [vmem:[#allocation2 + $0x42] sm:$0xff]
        %v1648 = vld [vmem:[#allocation2 + $0x52] sm:$0xff]
        %v1649 = vld [vmem:[#allocation2 + $0x62] sm:$0xff]
        %v1650 = vld [vmem:[#allocation2 + $0x72] sm:$0xff]
        %v1651 = vpack.c.bf16 %v1644, %v1643
        %v1652 = vpack.c.bf16 %v1646, %v1645
        %v1653 = vpack.c.bf16 %v1648, %v1647
        %v1654 = vpack.c.bf16 %v1650, %v1649
        %1655 = vrot.lane.b32.xlu0 %v1530, 112
        %v1656 = vpop.permute.xlu0 %1655
        %v1658 = vsel %vm1472, %v1656, 0
        %v1661 = vsel %vm1472, %v1651, 0
        %v1664 = vsel %vm1472, %v1652, 0
        %v1667 = vsel %vm1472, %v1653, 0
        %v1670 = vsel %vm1472, %v1654, 0
        %1672 = vmatprep.subr.bf16.mxu0 0
        %1673 = vmatpush1.bf16.xpose.msra.mxu0 %v1661
        %1674 = vmatprep.subr.bf16.mxu0 0
        %1675 = vmatpush1.bf16.xpose.msra.mxu0 %v1664
        %1676 = vmatprep.subr.bf16.mxu0 0
        %1677 = vmatpush1.bf16.xpose.msra.mxu0 %v1667
        %1678 = vmatprep.subr.bf16.mxu0 0
        %1679 = vmatpush1.bf16.xpose.msra.mxu0 %v1670
        %1680 = vmatprep.subr.bf16.mxu0 0
        %1681 = vmatpush1.bf16.xpose.msra.mxu0 0
        %1682 = vmatprep.subr.bf16.mxu0 0
        %1683 = vmatpush1.bf16.xpose.msra.mxu0 0
        %1684 = vmatprep.subr.bf16.mxu0 0
        %1685 = vmatpush1.bf16.xpose.msra.mxu0 0
        %1686 = vmatprep.subr.bf16.mxu0 0
        %1687 = vmatpush1.bf16.xpose.msra.mxu0 0
        %1688 = vmatprep.subr.bf16.mxu0 0
        %1689 = vmatpush1.bf16.xpose.msra.mxu0 0
        %1690 = vmatprep.subr.bf16.mxu0 0
        %1691 = vmatpush1.bf16.xpose.msra.mxu0 0
        %1692 = vmatprep.subr.bf16.mxu0 0
        %1693 = vmatpush1.bf16.xpose.msra.mxu0 0
        %1694 = vmatprep.subr.bf16.mxu0 0
        %1695 = vmatpush1.bf16.xpose.msra.mxu0 0
        %1696 = vmatprep.subr.bf16.mxu0 0
        %1697 = vmatpush1.bf16.xpose.msra.mxu0 0
        %1698 = vmatprep.subr.bf16.mxu0 0
        %1699 = vmatpush1.bf16.xpose.msra.mxu0 0
        %1700 = vmatprep.subr.bf16.mxu0 0
        %1701 = vmatpush1.bf16.xpose.msra.mxu0 0
        %1702 = vmatprep.subr.bf16.mxu0 0
        %1703 = vmatpush1.bf16.xpose.msra.mxu0 0
        %1704 = vmatprep.mubr.bf16.mxu0 0
        %1705 = vmatmul.mubr.bf16.gmra.mrb[0].mxu0 %v1658
        %v1706 = vpop.f32.mrb[0].mxu0
        %v1707 = vadd.f32 0.0, %v1706
        %v1708 = vpop.f32.mrb[0].mxu0
        %v1709 = vpop.f32.mrb[0].mxu0
        %v1710 = vpop.f32.mrb[0].mxu0
        %1711 = vdwg.mxu0
        %v1712 = vadd.f32 %v1638, %v1707
        %v1713 = vld [vmem:[%s1494] sm:$0xff]
        %v1714 = vld [vmem:[%s1494 + $0x10] sm:$0xff]
        %v1715 = vld [vmem:[%s1494 + $0x20] sm:$0xff]
        %v1716 = vld [vmem:[%s1494 + $0x30] sm:$0xff]
        %v1717 = vld [vmem:[%s1494 + $0x40] sm:$0xff]
        %v1718 = vld [vmem:[%s1494 + $0x50] sm:$0xff]
        %v1719 = vld [vmem:[%s1494 + $0x60] sm:$0xff]
        %v1720 = vld [vmem:[%s1494 + $0x70] sm:$0xff]
        %v1721 = vpack.c.bf16 %v1714, %v1713
        %v1722 = vpack.c.bf16 %v1716, %v1715
        %v1723 = vpack.c.bf16 %v1718, %v1717
        %v1724 = vpack.c.bf16 %v1720, %v1719
        %1725 = vrot.lane.b32.xlu0 %v1530, 104
        %v1726 = vpop.permute.xlu0 %1725
        %v1728 = vsel %vm1472, %v1726, 0
        %v1731 = vsel %vm1472, %v1721, 0
        %v1734 = vsel %vm1472, %v1722, 0
        %v1737 = vsel %vm1472, %v1723, 0
        %v1740 = vsel %vm1472, %v1724, 0
        %1742 = vmatprep.subr.bf16.mxu0 0
        %1743 = vmatpush1.bf16.xpose.msra.mxu0 %v1731
        %1744 = vmatprep.subr.bf16.mxu0 0
        %1745 = vmatpush1.bf16.xpose.msra.mxu0 %v1734
        %1746 = vmatprep.subr.bf16.mxu0 0
        %1747 = vmatpush1.bf16.xpose.msra.mxu0 %v1737
        %1748 = vmatprep.subr.bf16.mxu0 0
        %1749 = vmatpush1.bf16.xpose.msra.mxu0 %v1740
        %1750 = vmatprep.subr.bf16.mxu0 0
        %1751 = vmatpush1.bf16.xpose.msra.mxu0 0
        %1752 = vmatprep.subr.bf16.mxu0 0
        %1753 = vmatpush1.bf16.xpose.msra.mxu0 0
        %1754 = vmatprep.subr.bf16.mxu0 0
        %1755 = vmatpush1.bf16.xpose.msra.mxu0 0
        %1756 = vmatprep.subr.bf16.mxu0 0
        %1757 = vmatpush1.bf16.xpose.msra.mxu0 0
        %1758 = vmatprep.subr.bf16.mxu0 0
        %1759 = vmatpush1.bf16.xpose.msra.mxu0 0
        %1760 = vmatprep.subr.bf16.mxu0 0
        %1761 = vmatpush1.bf16.xpose.msra.mxu0 0
        %1762 = vmatprep.subr.bf16.mxu0 0
        %1763 = vmatpush1.bf16.xpose.msra.mxu0 0
        %1764 = vmatprep.subr.bf16.mxu0 0
        %1765 = vmatpush1.bf16.xpose.msra.mxu0 0
        %1766 = vmatprep.subr.bf16.mxu0 0
        %1767 = vmatpush1.bf16.xpose.msra.mxu0 0
        %1768 = vmatprep.subr.bf16.mxu0 0
        %1769 = vmatpush1.bf16.xpose.msra.mxu0 0
        %1770 = vmatprep.subr.bf16.mxu0 0
        %1771 = vmatpush1.bf16.xpose.msra.mxu0 0
        %1772 = vmatprep.subr.bf16.mxu0 0
        %1773 = vmatpush1.bf16.xpose.msra.mxu0 0
        %1774 = vmatprep.mubr.bf16.mxu0 0
        %1775 = vmatmul.mubr.bf16.gmra.mrb[0].mxu0 %v1728
        %v1776 = vpop.f32.mrb[0].mxu0
        %v1777 = vadd.f32 0.0, %v1776
        %v1778 = vpop.f32.mrb[0].mxu0
        %v1779 = vpop.f32.mrb[0].mxu0
        %v1780 = vpop.f32.mrb[0].mxu0
        %1781 = vdwg.mxu0
        %v1782 = vadd.f32 %v1712, %v1777
        %v1783 = vld [vmem:[%s1494 + $0x1] sm:$0xff]
        %v1784 = vld [vmem:[%s1494 + $0x11] sm:$0xff]
        %v1785 = vld [vmem:[%s1494 + $0x21] sm:$0xff]
        %v1786 = vld [vmem:[%s1494 + $0x31] sm:$0xff]
        %v1787 = vld [vmem:[%s1494 + $0x41] sm:$0xff]
        %v1788 = vld [vmem:[%s1494 + $0x51] sm:$0xff]
        %v1789 = vld [vmem:[%s1494 + $0x61] sm:$0xff]
        %v1790 = vld [vmem:[%s1494 + $0x71] sm:$0xff]
        %v1791 = vpack.c.bf16 %v1784, %v1783
        %v1792 = vpack.c.bf16 %v1786, %v1785
        %v1793 = vpack.c.bf16 %v1788, %v1787
        %v1794 = vpack.c.bf16 %v1790, %v1789
        %1795 = vrot.lane.b32.xlu0 %v1530, 96
        %v1796 = vpop.permute.xlu0 %1795
        %v1798 = vsel %vm1472, %v1796, 0
        %v1801 = vsel %vm1472, %v1791, 0
        %v1804 = vsel %vm1472, %v1792, 0
        %v1807 = vsel %vm1472, %v1793, 0
        %v1810 = vsel %vm1472, %v1794, 0
        %1812 = vmatprep.subr.bf16.mxu0 0
        %1813 = vmatpush1.bf16.xpose.msra.mxu0 %v1801
        %1814 = vmatprep.subr.bf16.mxu0 0
        %1815 = vmatpush1.bf16.xpose.msra.mxu0 %v1804
        %1816 = vmatprep.subr.bf16.mxu0 0
        %1817 = vmatpush1.bf16.xpose.msra.mxu0 %v1807
        %1818 = vmatprep.subr.bf16.mxu0 0
        %1819 = vmatpush1.bf16.xpose.msra.mxu0 %v1810
        %1820 = vmatprep.subr.bf16.mxu0 0
        %1821 = vmatpush1.bf16.xpose.msra.mxu0 0
        %1822 = vmatprep.subr.bf16.mxu0 0
        %1823 = vmatpush1.bf16.xpose.msra.mxu0 0
        %1824 = vmatprep.subr.bf16.mxu0 0
        %1825 = vmatpush1.bf16.xpose.msra.mxu0 0
        %1826 = vmatprep.subr.bf16.mxu0 0
        %1827 = vmatpush1.bf16.xpose.msra.mxu0 0
        %1828 = vmatprep.subr.bf16.mxu0 0
        %1829 = vmatpush1.bf16.xpose.msra.mxu0 0
        %1830 = vmatprep.subr.bf16.mxu0 0
        %1831 = vmatpush1.bf16.xpose.msra.mxu0 0
        %1832 = vmatprep.subr.bf16.mxu0 0
        %1833 = vmatpush1.bf16.xpose.msra.mxu0 0
        %1834 = vmatprep.subr.bf16.mxu0 0
        %1835 = vmatpush1.bf16.xpose.msra.mxu0 0
        %1836 = vmatprep.subr.bf16.mxu0 0
        %1837 = vmatpush1.bf16.xpose.msra.mxu0 0
        %1838 = vmatprep.subr.bf16.mxu0 0
        %1839 = vmatpush1.bf16.xpose.msra.mxu0 0
        %1840 = vmatprep.subr.bf16.mxu0 0
        %1841 = vmatpush1.bf16.xpose.msra.mxu0 0
        %1842 = vmatprep.subr.bf16.mxu0 0
        %1843 = vmatpush1.bf16.xpose.msra.mxu0 0
        %1844 = vmatprep.mubr.bf16.mxu0 0
        %1845 = vmatmul.mubr.bf16.gmra.mrb[0].mxu0 %v1798
        %v1846 = vpop.f32.mrb[0].mxu0
        %v1847 = vadd.f32 0.0, %v1846
        %v1848 = vpop.f32.mrb[0].mxu0
        %v1849 = vpop.f32.mrb[0].mxu0
        %v1850 = vpop.f32.mrb[0].mxu0
        %1851 = vdwg.mxu0
        %v1852 = vadd.f32 %v1782, %v1847
        %v1853 = vld [vmem:[%s1494 + $0x2] sm:$0xff]
        %v1854 = vld [vmem:[%s1494 + $0x12] sm:$0xff]
        %v1855 = vld [vmem:[%s1494 + $0x22] sm:$0xff]
        %v1856 = vld [vmem:[%s1494 + $0x32] sm:$0xff]
        %v1857 = vld [vmem:[%s1494 + $0x42] sm:$0xff]
        %v1858 = vld [vmem:[%s1494 + $0x52] sm:$0xff]
        %v1859 = vld [vmem:[%s1494 + $0x62] sm:$0xff]
        %v1860 = vld [vmem:[%s1494 + $0x72] sm:$0xff]
        %v1861 = vpack.c.bf16 %v1854, %v1853
        %v1862 = vpack.c.bf16 %v1856, %v1855
        %v1863 = vpack.c.bf16 %v1858, %v1857
        %v1864 = vpack.c.bf16 %v1860, %v1859
        %1865 = vrot.lane.b32.xlu0 %v1530, 88
        %v1866 = vpop.permute.xlu0 %1865
        %v1868 = vsel %vm1472, %v1866, 0
        %v1871 = vsel %vm1472, %v1861, 0
        %v1874 = vsel %vm1472, %v1862, 0
        %v1877 = vsel %vm1472, %v1863, 0
        %v1880 = vsel %vm1472, %v1864, 0
        %1882 = vmatprep.subr.bf16.mxu0 0
        %1883 = vmatpush1.bf16.xpose.msra.mxu0 %v1871
        %1884 = vmatprep.subr.bf16.mxu0 0
        %1885 = vmatpush1.bf16.xpose.msra.mxu0 %v1874
        %1886 = vmatprep.subr.bf16.mxu0 0
        %1887 = vmatpush1.bf16.xpose.msra.mxu0 %v1877
        %1888 = vmatprep.subr.bf16.mxu0 0
        %1889 = vmatpush1.bf16.xpose.msra.mxu0 %v1880
        %1890 = vmatprep.subr.bf16.mxu0 0
        %1891 = vmatpush1.bf16.xpose.msra.mxu0 0
        %1892 = vmatprep.subr.bf16.mxu0 0
        %1893 = vmatpush1.bf16.xpose.msra.mxu0 0
        %1894 = vmatprep.subr.bf16.mxu0 0
        %1895 = vmatpush1.bf16.xpose.msra.mxu0 0
        %1896 = vmatprep.subr.bf16.mxu0 0
        %1897 = vmatpush1.bf16.xpose.msra.mxu0 0
        %1898 = vmatprep.subr.bf16.mxu0 0
        %1899 = vmatpush1.bf16.xpose.msra.mxu0 0
        %1900 = vmatprep.subr.bf16.mxu0 0
        %1901 = vmatpush1.bf16.xpose.msra.mxu0 0
        %1902 = vmatprep.subr.bf16.mxu0 0
        %1903 = vmatpush1.bf16.xpose.msra.mxu0 0
        %1904 = vmatprep.subr.bf16.mxu0 0
        %1905 = vmatpush1.bf16.xpose.msra.mxu0 0
        %1906 = vmatprep.subr.bf16.mxu0 0
        %1907 = vmatpush1.bf16.xpose.msra.mxu0 0
        %1908 = vmatprep.subr.bf16.mxu0 0
        %1909 = vmatpush1.bf16.xpose.msra.mxu0 0
        %1910 = vmatprep.subr.bf16.mxu0 0
        %1911 = vmatpush1.bf16.xpose.msra.mxu0 0
        %1912 = vmatprep.subr.bf16.mxu0 0
        %1913 = vmatpush1.bf16.xpose.msra.mxu0 0
        %1914 = vmatprep.mubr.bf16.mxu0 0
        %1915 = vmatmul.mubr.bf16.gmra.mrb[0].mxu0 %v1868
        %v1916 = vpop.f32.mrb[0].mxu0
        %v1917 = vadd.f32 0.0, %v1916
        %v1918 = vpop.f32.mrb[0].mxu0
        %v1919 = vpop.f32.mrb[0].mxu0
        %v1920 = vpop.f32.mrb[0].mxu0
        %1921 = vdwg.mxu0
        %v1922 = vadd.f32 %v1852, %v1917
        %s1923 = scalar_lea.vmem [#allocation2], 32
        %v1924 = vld [vmem:[%s1923] sm:$0xff]
        %v1925 = vld [vmem:[%s1923 + $0x10] sm:$0xff]
        %v1926 = vld [vmem:[%s1923 + $0x20] sm:$0xff]
        %v1927 = vld [vmem:[%s1923 + $0x30] sm:$0xff]
        %v1928 = vld [vmem:[%s1923 + $0x40] sm:$0xff]
        %v1929 = vld [vmem:[%s1923 + $0x50] sm:$0xff]
        %v1930 = vld [vmem:[%s1923 + $0x60] sm:$0xff]
        %v1931 = vld [vmem:[%s1923 + $0x70] sm:$0xff]
        %v1932 = vpack.c.bf16 %v1925, %v1924
        %v1933 = vpack.c.bf16 %v1927, %v1926
        %v1934 = vpack.c.bf16 %v1929, %v1928
        %v1935 = vpack.c.bf16 %v1931, %v1930
        %1936 = vrot.lane.b32.xlu0 %v1530, 80
        %v1937 = vpop.permute.xlu0 %1936
        %v1939 = vsel %vm1472, %v1937, 0
        %v1942 = vsel %vm1472, %v1932, 0
        %v1945 = vsel %vm1472, %v1933, 0
        %v1948 = vsel %vm1472, %v1934, 0
        %v1951 = vsel %vm1472, %v1935, 0
        %1953 = vmatprep.subr.bf16.mxu0 0
        %1954 = vmatpush1.bf16.xpose.msra.mxu0 %v1942
        %1955 = vmatprep.subr.bf16.mxu0 0
        %1956 = vmatpush1.bf16.xpose.msra.mxu0 %v1945
        %1957 = vmatprep.subr.bf16.mxu0 0
        %1958 = vmatpush1.bf16.xpose.msra.mxu0 %v1948
        %1959 = vmatprep.subr.bf16.mxu0 0
        %1960 = vmatpush1.bf16.xpose.msra.mxu0 %v1951
        %1961 = vmatprep.subr.bf16.mxu0 0
        %1962 = vmatpush1.bf16.xpose.msra.mxu0 0
        %1963 = vmatprep.subr.bf16.mxu0 0
        %1964 = vmatpush1.bf16.xpose.msra.mxu0 0
        %1965 = vmatprep.subr.bf16.mxu0 0
        %1966 = vmatpush1.bf16.xpose.msra.mxu0 0
        %1967 = vmatprep.subr.bf16.mxu0 0
        %1968 = vmatpush1.bf16.xpose.msra.mxu0 0
        %1969 = vmatprep.subr.bf16.mxu0 0
        %1970 = vmatpush1.bf16.xpose.msra.mxu0 0
        %1971 = vmatprep.subr.bf16.mxu0 0
        %1972 = vmatpush1.bf16.xpose.msra.mxu0 0
        %1973 = vmatprep.subr.bf16.mxu0 0
        %1974 = vmatpush1.bf16.xpose.msra.mxu0 0
        %1975 = vmatprep.subr.bf16.mxu0 0
        %1976 = vmatpush1.bf16.xpose.msra.mxu0 0
        %1977 = vmatprep.subr.bf16.mxu0 0
        %1978 = vmatpush1.bf16.xpose.msra.mxu0 0
        %1979 = vmatprep.subr.bf16.mxu0 0
        %1980 = vmatpush1.bf16.xpose.msra.mxu0 0
        %1981 = vmatprep.subr.bf16.mxu0 0
        %1982 = vmatpush1.bf16.xpose.msra.mxu0 0
        %1983 = vmatprep.subr.bf16.mxu0 0
        %1984 = vmatpush1.bf16.xpose.msra.mxu0 0
        %1985 = vmatprep.mubr.bf16.mxu0 0
        %1986 = vmatmul.mubr.bf16.gmra.mrb[0].mxu0 %v1939
        %v1987 = vpop.f32.mrb[0].mxu0
        %v1988 = vadd.f32 0.0, %v1987
        %v1989 = vpop.f32.mrb[0].mxu0
        %v1990 = vpop.f32.mrb[0].mxu0
        %v1991 = vpop.f32.mrb[0].mxu0
        %1992 = vdwg.mxu0
        %v1993 = vadd.f32 %v1922, %v1988
        %v1994 = vld [vmem:[%s1923 + $0x1] sm:$0xff]
        %v1995 = vld [vmem:[%s1923 + $0x11] sm:$0xff]
        %v1996 = vld [vmem:[%s1923 + $0x21] sm:$0xff]
        %v1997 = vld [vmem:[%s1923 + $0x31] sm:$0xff]
        %v1998 = vld [vmem:[%s1923 + $0x41] sm:$0xff]
        %v1999 = vld [vmem:[%s1923 + $0x51] sm:$0xff]
        %v2000 = vld [vmem:[%s1923 + $0x61] sm:$0xff]
        %v2001 = vld [vmem:[%s1923 + $0x71] sm:$0xff]
        %v2002 = vpack.c.bf16 %v1995, %v1994
        %v2003 = vpack.c.bf16 %v1997, %v1996
        %v2004 = vpack.c.bf16 %v1999, %v1998
        %v2005 = vpack.c.bf16 %v2001, %v2000
        %2006 = vrot.lane.b32.xlu0 %v1530, 72
        %v2007 = vpop.permute.xlu0 %2006
        %v2009 = vsel %vm1472, %v2007, 0
        %v2012 = vsel %vm1472, %v2002, 0
        %v2015 = vsel %vm1472, %v2003, 0
        %v2018 = vsel %vm1472, %v2004, 0
        %v2021 = vsel %vm1472, %v2005, 0
        %2023 = vmatprep.subr.bf16.mxu0 0
        %2024 = vmatpush1.bf16.xpose.msra.mxu0 %v2012
        %2025 = vmatprep.subr.bf16.mxu0 0
        %2026 = vmatpush1.bf16.xpose.msra.mxu0 %v2015
        %2027 = vmatprep.subr.bf16.mxu0 0
        %2028 = vmatpush1.bf16.xpose.msra.mxu0 %v2018
        %2029 = vmatprep.subr.bf16.mxu0 0
        %2030 = vmatpush1.bf16.xpose.msra.mxu0 %v2021
        %2031 = vmatprep.subr.bf16.mxu0 0
        %2032 = vmatpush1.bf16.xpose.msra.mxu0 0
        %2033 = vmatprep.subr.bf16.mxu0 0
        %2034 = vmatpush1.bf16.xpose.msra.mxu0 0
        %2035 = vmatprep.subr.bf16.mxu0 0
        %2036 = vmatpush1.bf16.xpose.msra.mxu0 0
        %2037 = vmatprep.subr.bf16.mxu0 0
        %2038 = vmatpush1.bf16.xpose.msra.mxu0 0
        %2039 = vmatprep.subr.bf16.mxu0 0
        %2040 = vmatpush1.bf16.xpose.msra.mxu0 0
        %2041 = vmatprep.subr.bf16.mxu0 0
        %2042 = vmatpush1.bf16.xpose.msra.mxu0 0
        %2043 = vmatprep.subr.bf16.mxu0 0
        %2044 = vmatpush1.bf16.xpose.msra.mxu0 0
        %2045 = vmatprep.subr.bf16.mxu0 0
        %2046 = vmatpush1.bf16.xpose.msra.mxu0 0
        %2047 = vmatprep.subr.bf16.mxu0 0
        %2048 = vmatpush1.bf16.xpose.msra.mxu0 0
        %2049 = vmatprep.subr.bf16.mxu0 0
        %2050 = vmatpush1.bf16.xpose.msra.mxu0 0
        %2051 = vmatprep.subr.bf16.mxu0 0
        %2052 = vmatpush1.bf16.xpose.msra.mxu0 0
        %2053 = vmatprep.subr.bf16.mxu0 0
        %2054 = vmatpush1.bf16.xpose.msra.mxu0 0
        %2055 = vmatprep.mubr.bf16.mxu0 0
        %2056 = vmatmul.mubr.bf16.gmra.mrb[0].mxu0 %v2009
        %v2057 = vpop.f32.mrb[0].mxu0
        %v2058 = vadd.f32 0.0, %v2057
        %v2059 = vpop.f32.mrb[0].mxu0
        %v2060 = vpop.f32.mrb[0].mxu0
        %v2061 = vpop.f32.mrb[0].mxu0
        %2062 = vdwg.mxu0
        %v2063 = vadd.f32 %v1993, %v2058
        %v2064 = vld [vmem:[%s1923 + $0x2] sm:$0xff]
        %v2065 = vld [vmem:[%s1923 + $0x12] sm:$0xff]
        %v2066 = vld [vmem:[%s1923 + $0x22] sm:$0xff]
        %v2067 = vld [vmem:[%s1923 + $0x32] sm:$0xff]
        %v2068 = vld [vmem:[%s1923 + $0x42] sm:$0xff]
        %v2069 = vld [vmem:[%s1923 + $0x52] sm:$0xff]
        %v2070 = vld [vmem:[%s1923 + $0x62] sm:$0xff]
        %v2071 = vld [vmem:[%s1923 + $0x72] sm:$0xff]
        %v2072 = vpack.c.bf16 %v2065, %v2064
        %v2073 = vpack.c.bf16 %v2067, %v2066
        %v2074 = vpack.c.bf16 %v2069, %v2068
        %v2075 = vpack.c.bf16 %v2071, %v2070
        %2076 = vrot.lane.b32.xlu0 %v1530, 64
        %v2077 = vpop.permute.xlu0 %2076
        %v2079 = vsel %vm1472, %v2077, 0
        %v2082 = vsel %vm1472, %v2072, 0
        %v2085 = vsel %vm1472, %v2073, 0
        %v2088 = vsel %vm1472, %v2074, 0
        %v2091 = vsel %vm1472, %v2075, 0
        %2093 = vmatprep.subr.bf16.mxu0 0
        %2094 = vmatpush1.bf16.xpose.msra.mxu0 %v2082
        %2095 = vmatprep.subr.bf16.mxu0 0
        %2096 = vmatpush1.bf16.xpose.msra.mxu0 %v2085
        %2097 = vmatprep.subr.bf16.mxu0 0
        %2098 = vmatpush1.bf16.xpose.msra.mxu0 %v2088
        %2099 = vmatprep.subr.bf16.mxu0 0
        %2100 = vmatpush1.bf16.xpose.msra.mxu0 %v2091
        %2101 = vmatprep.subr.bf16.mxu0 0
        %2102 = vmatpush1.bf16.xpose.msra.mxu0 0
        %2103 = vmatprep.subr.bf16.mxu0 0
        %2104 = vmatpush1.bf16.xpose.msra.mxu0 0
        %2105 = vmatprep.subr.bf16.mxu0 0
        %2106 = vmatpush1.bf16.xpose.msra.mxu0 0
        %2107 = vmatprep.subr.bf16.mxu0 0
        %2108 = vmatpush1.bf16.xpose.msra.mxu0 0
        %2109 = vmatprep.subr.bf16.mxu0 0
        %2110 = vmatpush1.bf16.xpose.msra.mxu0 0
        %2111 = vmatprep.subr.bf16.mxu0 0
        %2112 = vmatpush1.bf16.xpose.msra.mxu0 0
        %2113 = vmatprep.subr.bf16.mxu0 0
        %2114 = vmatpush1.bf16.xpose.msra.mxu0 0
        %2115 = vmatprep.subr.bf16.mxu0 0
        %2116 = vmatpush1.bf16.xpose.msra.mxu0 0
        %2117 = vmatprep.subr.bf16.mxu0 0
        %2118 = vmatpush1.bf16.xpose.msra.mxu0 0
        %2119 = vmatprep.subr.bf16.mxu0 0
        %2120 = vmatpush1.bf16.xpose.msra.mxu0 0
        %2121 = vmatprep.subr.bf16.mxu0 0
        %2122 = vmatpush1.bf16.xpose.msra.mxu0 0
        %2123 = vmatprep.subr.bf16.mxu0 0
        %2124 = vmatpush1.bf16.xpose.msra.mxu0 0
        %2125 = vmatprep.mubr.bf16.mxu0 0
        %2126 = vmatmul.mubr.bf16.gmra.mrb[0].mxu0 %v2079
        %v2127 = vpop.f32.mrb[0].mxu0
        %v2128 = vadd.f32 0.0, %v2127
        %v2129 = vpop.f32.mrb[0].mxu0
        %v2130 = vpop.f32.mrb[0].mxu0
        %v2131 = vpop.f32.mrb[0].mxu0
        %2132 = vdwg.mxu0
        %v2133 = vadd.f32 %v2063, %v2128
        %v2134 = vld [vmem:[%s4] sm:$0xff]
        %2136 = vset.pattern.permute.xlu0 0
        %2137 = vperm.xlu0 %2136, %v2134
        %v2138 = vpop.permute.xlu0 %2137
        %v2140 = vadd.f32 %v2133, %v2138
        %v2141 = vld [vmem:[%s266] sm:$0xf]
        %vm2142 = vcmask 1043456
        %v2143 = vsel %vm2142, %v2141, 0.0
        %v2144 = vadd.f32 %v2140, %v2143
        %v2145 = vmax.f32 %v2144, 0.0
        %vm2146 = vcmask 523264
        %2147 = vst.msk [vmem:[%s257] sm:$0xff] %vm2146, %v2145
        %s2148 = sand.u32 %s164, 1
        %s2149 = scalar_lea.sflag [#allocation4], %s2148
        %s2150 = sand.u32 %s164, 1
        %s2151 = smul.addr %s2150, 8
        %s2152 = scalar_lea.vmem [#allocation3], %s2151
        // Predicated region
        $region45: #{tpu_custom_call.1} parent=43 // pred_check
          %p2153 = pneg %p174
        $region46: #{tpu_custom_call.1} parent=43 // pred_check_branch
          %2155 = sbr.rel (%p2153) target = $region48
        $region47: #{tpu_custom_call.1} parent=43 // pred_region
          %s2157 = ssub.s32 128, 128
          %2158 = vsyncadd %s2149, %s2157
          %s2159 = smul.addr %s20, 128
          %s2160 = scalar_lea.hbm %s6, %s2159
          %s2162 = sshll.u32 %s2152, 4
          %s2163 = int_to_ptr.vmem [resolvable:$true] %s2162
          %2165 = dma.vmem_to_hbm [thread:$0]  %s2163, 128, %s2160, %s2149
        $region48: #{tpu_custom_call.1} parent=43 // pred_fallthru
          _
      $region44: #{tpu_custom_call.1} parent=5 // pred_fallthru
        _
      %p2166 = scmp.le.s32.totalorder 2, %s15
      // Predicated region
      $region49: #{tpu_custom_call.1} parent=5 // pred_check
        %p2167 = pneg %p2166
      $region50: #{tpu_custom_call.1} parent=5 // pred_check_branch
        %2169 = sbr.rel (%p2167) target = $region52
      $region51: #{tpu_custom_call.1} parent=5 // pred_region
        %s2170 = ssub.s32 %s15, 2
        // Predicated region
        $region53: #{tpu_custom_call.1} parent=51 // pred_check
          %p2171 = pneg %p180
        $region54: #{tpu_custom_call.1} parent=51 // pred_check_branch
          %2173 = sbr.rel (%p2171) target = $region56
        $region55: #{tpu_custom_call.1} parent=51 // pred_region
          %s2174 = sand.u32 %s165, 1
          %s2175 = scalar_lea.sflag [#allocation4], %s2174
          %s2176 = sand.u32 %s165, 1
          %s2177 = smul.addr %s2176, 8
          %s2178 = scalar_lea.vmem [#allocation3], %s2177
          %2179 = dma.done %s2175, 128
        $region56: #{tpu_custom_call.1} parent=51 // pred_fallthru
          _
      $region52: #{tpu_custom_call.1} parent=5 // pred_fallthru
        _
    $region6: #{tpu_custom_call.1} parent=1 // loop_footer
      %s19 = sadd.s32 1, %s15
    $region7: #{tpu_custom_call.1} parent=1 // loop_footer_branch
      %14 = sbr.rel target = $region3
    $region8: #{tpu_custom_call.1} parent=1 // loop_exit
      _
    %2180 = vsyncpa [#allocation4], 1
    %s2181 = scalar_lea.sflag [#allocation4], 1
    %2182 = vsyncpa %s2181, 1

</llo_original>
